<compile_context>
chip_gen: v5e
topology: v5e:2x2
jax: 0.10.0
libtpu: 0.0.40
codegen_flags: <defaults>
</compile_context>

<pallas_src>
import functools

import jax
import jax.numpy as jnp
import numpy as np
from jax.experimental import pallas as pl
from jax.experimental.pallas import tpu as pltpu


def _gae_kernel(s_ref, ns_ref, r_ref, nd_ref, w_ref, b_ref, g_ref, out_ref):
    """One grid step processes one batch tile.

    s_ref / ns_ref : (BB, D, T)  VMEM   state / next_state (time lane-dense, D on sublanes)
    r_ref / nd_ref : (BB, T)     VMEM   reward / not_done  (time lane-dense)
    w_ref          : (D, 1)      VMEM   value-function weights (column)
    b_ref          : (1, 1)      SMEM   value-function bias (scalar)
    g_ref          : (T, T)      VMEM   G[k, t] = (lambda*gamma)^(k-t) for k >= t, else 0
    out_ref        : (BB, T)     VMEM
    """
    w3 = w_ref[...][None, :, :]          # (1, D, 1) -> broadcast over (BB, D, T)
    bias = b_ref[0, 0]

    # Value head on the VPU: lane-dense broadcast-multiply + sublane reduce -> (BB, T).
    v_s = jnp.sum(s_ref[...] * w3, axis=1)
    v_ns = jnp.sum(ns_ref[...] * w3, axis=1)

    nd = nd_ref[...]
    # TD error exactly as in the reference forward: r + V(s') * not_done - V(s).
    td = r_ref[...] + nd * (v_ns + bias) - (v_s + bias)

    # Reverse discounted cumsum over time as a lane-dense MXU matmul:
    #   out[b, t] = sum_{k >= t} (lambda*gamma)^(k-t) * td[b, k]  ==  td @ G
    out_ref[...] = jnp.dot(td, g_ref[...], preferred_element_type=jnp.float32)


def _round_up(x, m):
    return -(-x // m) * m


def _pick_batch_tile(B, D, T):
    """Pick the batch tile (rows per grid step).

    Preferences, in order:
      * divides B exactly (no jnp.pad -> no extra HBM pass over the state tensors),
      * multiple of 8 (sublane alignment for the (BB, T) blocks),
      * as large as a conservative VMEM budget allows (amortizes per-step DMA / grid
        overhead and keeps the MXU streaming many LHS rows per step),
      * leaves >= 2 grid steps so v7x's two TensorCores both get a tile.
    Returns 0 if no multiple-of-8 divisor of B exists (caller falls back to padding).
    """
    d_pad = _round_up(D, 8)
    t_pad = _round_up(T, 128)
    per_row = 2 * 2 * d_pad * t_pad * 4        # state + next_state, double-buffered, f32
    bb_max = min(256, max(8, (24 << 20) // per_row))   # stay well inside v7x's 64 MiB VMEM
    bb_max -= bb_max % 8
    if B <= 8:
        return B                               # single step; block == full array
    cands = [bb for bb in range(8, min(bb_max, B) + 1, 8) if B % bb == 0]
    if not cands:
        return 0
    multi = [bb for bb in cands if B // bb >= 2]
    return max(multi) if multi else max(cands)


@functools.partial(jax.jit, static_argnames=("td_lambda", "gamma"))
def gae_forward(state, next_state, reward, done, w, bias, *, td_lambda, gamma):
    """GAE forward. state/next_state: [B,T,D] f32, reward: [B,T] f32, done: [B,T] bool."""
    B, T, D = state.shape
    lg = float(td_lambda) * float(gamma)

    BB = _pick_batch_tile(B, D, T)

    # Lane-dense layout for the dominant tensors: put time T on lanes, D on sublanes.
    # The transpose fuses with the f32 cast into one XLA pass over the states.
    # TODO(synk): accept (B, D, T) / bf16 states directly from upstream so this extra HBM
    # pass (and the f32 upcast) disappears entirely; the kernel is HBM-bandwidth-bound.
    state_f = jnp.swapaxes(state.astype(jnp.float32), 1, 2)          # (B, D, T)
    next_state_f = jnp.swapaxes(next_state.astype(jnp.float32), 1, 2)
    reward_f = reward.astype(jnp.float32)
    not_done_f = jnp.logical_not(done).astype(jnp.float32)

    if BB == 0:
        # No clean multiple-of-8 divisor of B: fall back to BB=8 with batch padding.
        # TODO(synk): mask the ragged trailing tile in-kernel (pl.when / masked store)
        # instead of padding the full state tensors (padding is an extra HBM pass).
        BB = 8
        Bp = _round_up(B, BB)
        pad = Bp - B
        state_f = jnp.pad(state_f, ((0, pad), (0, 0), (0, 0)))
        next_state_f = jnp.pad(next_state_f, ((0, pad), (0, 0), (0, 0)))
        reward_f = jnp.pad(reward_f, ((0, pad), (0, 0)))
        not_done_f = jnp.pad(not_done_f, ((0, pad), (0, 0)))
    else:
        Bp = B

    w_col = jnp.asarray(w, jnp.float32).reshape(D, 1)
    bias2 = jnp.asarray(bias, jnp.float32).reshape(1, 1)

    # Discount matrix, built with numpy at trace time (td_lambda, gamma, T are static):
    #   G[k, t] = (lambda*gamma)^(k - t) for k >= t, else 0, so out = td @ G.
    # TODO(synk): for T in the thousands, replace the dense T x T matmul with a blocked
    # reverse cumsum over time tiles (per-block td @ G_block plus a scalar (lambda*gamma)^Tb
    # carry, time-block axis last and "arbitrary"); dense G is O(T^2) f32 and alone exhausts
    # v7x's 64 MiB VMEM around T ~ 4K.  At that point also single-buffer G.
    idx = np.arange(T)
    diff = idx[:, None] - idx[None, :]
    g_np = np.where(diff >= 0, np.power(lg, np.maximum(diff, 0)), 0.0).astype(np.float32)
    g_mat = jnp.asarray(g_np)

    # Explicit VMEM budget: v5e's scoped default is 16 MiB; cap at 64 MiB so the same
    # config is safe on v7x (64 MiB physical VMEM).
    d_pad = _round_up(D, 8)
    t_pad = _round_up(T, 128)
    bb_pad = _round_up(BB, 8)
    state_tile = BB * d_pad * t_pad * 4
    bt_tile = bb_pad * t_pad * 4
    g_tile = _round_up(T, 8) * t_pad * 4
    dbuf = 2  # default double-buffering on pipelined operands
    vmem_needed = (dbuf * 2 * state_tile     # state + next_state tiles
                   + dbuf * 2 * bt_tile      # reward + not_done tiles
                   + dbuf * g_tile           # discount matrix (constant index -> one DMA)
                   + dbuf * bt_tile          # output tile
                   + dbuf * d_pad * 128 * 4) # value weights
    vmem_limit = int(min(max(vmem_needed + (8 << 20), 32 << 20), 64 << 20))

    cost = pl.CostEstimate(
        flops=int(2 * Bp * T * T + 4 * Bp * T * D + 8 * Bp * T),
        transcendentals=0,
        bytes_accessed=int(4 * (2 * Bp * T * D + 3 * Bp * T + T * T + D + 1)),
    )

    out = pl.pallas_call(
        _gae_kernel,
        out_shape=jax.ShapeDtypeStruct((Bp, T), jnp.float32),
        grid=(Bp // BB,),
        in_specs=[
            pl.BlockSpec((BB, D, T), lambda i: (i, 0, 0)),       # state (B, D, T)
            pl.BlockSpec((BB, D, T), lambda i: (i, 0, 0)),       # next_state (B, D, T)
            pl.BlockSpec((BB, T), lambda i: (i, 0)),             # reward (lane-dense)
            pl.BlockSpec((BB, T), lambda i: (i, 0)),             # not_done (lane-dense)
            pl.BlockSpec((D, 1), lambda i: (0, 0)),              # value-fn weights (column)
            pl.BlockSpec(memory_space=pltpu.MemorySpace.SMEM),   # value-fn bias (scalar)
            pl.BlockSpec((T, T), lambda i: (0, 0)),              # discount matrix
        ],
        out_specs=pl.BlockSpec((BB, T), lambda i: (i, 0)),
        compiler_params=pltpu.CompilerParams(
            dimension_semantics=("parallel",),
            vmem_limit_bytes=vmem_limit),
        cost_estimate=cost,
    )(state_f, next_state_f, reward_f, not_done_f, w_col, bias2, g_mat)

    return out[:B]


def gae_reference(state, next_state, reward, done, w, bias, *, td_lambda, gamma):
    """Pure-JAX reference (sequential reverse recursion)."""
    lg = td_lambda * gamma
    wv = jnp.asarray(w, jnp.float32)[:, 0]
    v_s = state @ wv + bias
    v_ns = next_state @ wv + bias
    not_done = jnp.logical_not(done).astype(jnp.float32)
    td = reward + v_ns * not_done - v_s                     # (B, T)

    def step(carry, x):
        adv = x + lg * carry
        return adv, adv

    _, adv_rev = jax.lax.scan(step, jnp.zeros(td.shape[0], jnp.float32),
                              td.T[::-1])                   # scan over reversed time
    return adv_rev[::-1].T                                  # (B, T)


if __name__ == "__main__":
    # Small demo shapes: B=64 gives a 2-step batch grid with 32-row tiles (no padding),
    # exercising the larger-tile path and the megacore-parallel axis.
    B, T, D = 64, 128, 32
    td_lambda, gamma = 0.95, 0.99

    key = jax.random.PRNGKey(0)
    k_s, k_ns, k_r, k_d, k_w, k_b = jax.random.split(key, 6)

    state = jax.random.normal(k_s, (B, T, D), dtype=jnp.float32)
    next_state = jax.random.normal(k_ns, (B, T, D), dtype=jnp.float32)
    reward = jax.random.normal(k_r, (B, T), dtype=jnp.float32)
    done = jax.random.bernoulli(k_d, 0.1, (B, T))

    # Deterministic value-function parameters (linear head D -> 1).
    w = (jax.random.normal(k_w, (D, 1), dtype=jnp.float32) / jnp.sqrt(D)).astype(jnp.float32)
    bias = jax.random.normal(k_b, (), dtype=jnp.float32) * 0.1

    out = gae_forward(state, next_state, reward, done, w, bias,
                      td_lambda=td_lambda, gamma=gamma)
    out = jax.block_until_ready(out)

    ref = gae_reference(state, next_state, reward, done, w, bias,
                        td_lambda=td_lambda, gamma=gamma)
    ref = jax.block_until_ready(ref)

    assert out.shape == (B, T) and out.dtype == jnp.float32
    np.testing.assert_allclose(np.asarray(out), np.asarray(ref), rtol=1e-3, atol=1e-3)
    print("KERNEL_OK")
</pallas_src>

<mosaic_0001>
module attributes {stable_mosaic.version = 11 : i64} {
  func.func @_gae_kernel(%arg0: i32, %arg1: memref<32x32x128xf32, #tpu.memory_space<vmem>>, %arg2: memref<32x32x128xf32, #tpu.memory_space<vmem>>, %arg3: memref<32x128xf32, #tpu.memory_space<vmem>>, %arg4: memref<32x128xf32, #tpu.memory_space<vmem>>, %arg5: memref<32x1xf32, #tpu.memory_space<vmem>>, %arg6: memref<1x1xf32, #tpu.memory_space<smem>>, %arg7: memref<128x128xf32, #tpu.memory_space<vmem>>, %arg8: memref<32x128xf32, #tpu.memory_space<vmem>>) attributes {dimension_semantics = [#tpu.dimension_semantics<parallel>], iteration_bounds = array<i64: 2>, scalar_prefetch = 0 : i64, scratch_operands = 0 : i64, tpu.core_type = #tpu.core_type<tc>, window_params = [{transform_indices = @transform_0, window_bounds = array<i64: 32, 32, 128>}, {transform_indices = @transform_1, window_bounds = array<i64: 32, 32, 128>}, {transform_indices = @transform_2, window_bounds = array<i64: 32, 128>}, {transform_indices = @transform_3, window_bounds = array<i64: 32, 128>}, {pipeline_mode = #tpu.pipeline_mode<synchronous>, transform_indices = @transform_4, window_bounds = array<i64: 32, 1>}, {transform_indices = @transform_5, window_bounds = array<i64: 1, 1>}, {pipeline_mode = #tpu.pipeline_mode<synchronous>, transform_indices = @transform_6, window_bounds = array<i64: 128, 128>}, {transform_indices = @transform_7, window_bounds = array<i64: 32, 128>}]} {
    %c0 = arith.constant 0 : index
    %c0_0 = arith.constant 0 : index
    %0 = vector.load %arg5[%c0, %c0_0] : memref<32x1xf32, #tpu.memory_space<vmem>>, vector<32x1xf32>
    %1 = vector.shape_cast %0 : vector<32x1xf32> to vector<1x32x1xf32>
    %c0_1 = arith.constant 0 : index
    %c0_2 = arith.constant 0 : index
    %2 = memref.load %arg6[%c0_1, %c0_2] : memref<1x1xf32, #tpu.memory_space<smem>>
    %c0_3 = arith.constant 0 : index
    %c0_4 = arith.constant 0 : index
    %c0_5 = arith.constant 0 : index
    %3 = vector.load %arg1[%c0_3, %c0_4, %c0_5] : memref<32x32x128xf32, #tpu.memory_space<vmem>>, vector<32x32x128xf32>
    %4 = vector.broadcast %1 : vector<1x32x1xf32> to vector<32x32x128xf32>
    %5 = arith.mulf %3, %4 : vector<32x32x128xf32>
    %cst = arith.constant dense<0.000000e+00> : vector<32x128xf32>
    %6 = vector.multi_reduction <add>, %5, %cst [1] : vector<32x32x128xf32> to vector<32x128xf32>
    %c0_6 = arith.constant 0 : index
    %c0_7 = arith.constant 0 : index
    %c0_8 = arith.constant 0 : index
    %7 = vector.load %arg2[%c0_6, %c0_7, %c0_8] : memref<32x32x128xf32, #tpu.memory_space<vmem>>, vector<32x32x128xf32>
    %8 = vector.broadcast %1 : vector<1x32x1xf32> to vector<32x32x128xf32>
    %9 = arith.mulf %7, %8 : vector<32x32x128xf32>
    %cst_9 = arith.constant dense<0.000000e+00> : vector<32x128xf32>
    %10 = vector.multi_reduction <add>, %9, %cst_9 [1] : vector<32x32x128xf32> to vector<32x128xf32>
    %c0_10 = arith.constant 0 : index
    %c0_11 = arith.constant 0 : index
    %11 = vector.load %arg4[%c0_10, %c0_11] : memref<32x128xf32, #tpu.memory_space<vmem>>, vector<32x128xf32>
    %c0_12 = arith.constant 0 : index
    %c0_13 = arith.constant 0 : index
    %12 = vector.load %arg3[%c0_12, %c0_13] : memref<32x128xf32, #tpu.memory_space<vmem>>, vector<32x128xf32>
    %13 = vector.broadcast %2 : f32 to vector<32x128xf32>
    %14 = arith.addf %10, %13 : vector<32x128xf32>
    %15 = arith.mulf %11, %14 : vector<32x128xf32>
    %16 = arith.addf %12, %15 : vector<32x128xf32>
    %17 = vector.broadcast %2 : f32 to vector<32x128xf32>
    %18 = arith.addf %6, %17 : vector<32x128xf32>
    %19 = arith.subf %16, %18 : vector<32x128xf32>
    %c0_14 = arith.constant 0 : index
    %c0_15 = arith.constant 0 : index
    %20 = vector.load %arg7[%c0_14, %c0_15] : memref<128x128xf32, #tpu.memory_space<vmem>>, vector<128x128xf32>
    %cst_16 = arith.constant dense<0.000000e+00> : vector<32x128xf32>
    %21 = tpu.matmul %19, %20, %cst_16 {dimension_numbers = #tpu.dot_dimension_numbers<[1], [0], [0], [1], [0, 0, 1, 1], [], []>} : vector<32x128xf32>, vector<128x128xf32>, vector<32x128xf32> -> vector<32x128xf32>
    %c0_17 = arith.constant 0 : index
    %c0_18 = arith.constant 0 : index
    %22 = vector.load %arg8[%c0_17, %c0_18] : memref<32x128xf32, #tpu.memory_space<vmem>>, vector<32x128xf32>
    tpu.vector_store %arg8[%c0_17, %c0_18], %21 {strides = array<i32>} : memref<32x128xf32, #tpu.memory_space<vmem>>, vector<32x128xf32>,
    return
  }
  func.func @transform_0(%arg0: i32) -> (i32, i32, i32) {
    %c0_i32 = arith.constant 0 : i32
    %c0_i32_0 = arith.constant 0 : i32
    %c0_i32_1 = arith.constant 0 : i32
    return %arg0, %c0_i32, %c0_i32_0 : i32, i32, i32
  }
  func.func @transform_1(%arg0: i32) -> (i32, i32, i32) {
    %c0_i32 = arith.constant 0 : i32
    %c0_i32_0 = arith.constant 0 : i32
    %c0_i32_1 = arith.constant 0 : i32
    return %arg0, %c0_i32, %c0_i32_0 : i32, i32, i32
  }
  func.func @transform_2(%arg0: i32) -> (i32, i32) {
    %c0_i32 = arith.constant 0 : i32
    %c0_i32_0 = arith.constant 0 : i32
    return %arg0, %c0_i32 : i32, i32
  }
  func.func @transform_3(%arg0: i32) -> (i32, i32) {
    %c0_i32 = arith.constant 0 : i32
    %c0_i32_0 = arith.constant 0 : i32
    return %arg0, %c0_i32 : i32, i32
  }
  func.func @transform_4(%arg0: i32) -> (i32, i32) {
    %c0_i32 = arith.constant 0 : i32
    %c0_i32_0 = arith.constant 0 : i32
    %c0_i32_1 = arith.constant 0 : i32
    return %c0_i32, %c0_i32_0 : i32, i32
  }
  func.func @transform_5(%arg0: i32) -> (i32, i32) {
    %c0_i32 = arith.constant 0 : i32
    %c0_i32_0 = arith.constant 0 : i32
    %c0_i32_1 = arith.constant 0 : i32
    return %c0_i32, %c0_i32_0 : i32, i32
  }
  func.func @transform_6(%arg0: i32) -> (i32, i32) {
    %c0_i32 = arith.constant 0 : i32
    %c0_i32_0 = arith.constant 0 : i32
    %c0_i32_1 = arith.constant 0 : i32
    return %c0_i32, %c0_i32_0 : i32, i32
  }
  func.func @transform_7(%arg0: i32) -> (i32, i32) {
    %c0_i32 = arith.constant 0 : i32
    %c0_i32_0 = arith.constant 0 : i32
    return %arg0, %c0_i32 : i32, i32
  }
}

</mosaic_0001>

<llo_original>
// kernel: gae_forward.1
$region0: #{gae_forward.1}
  #allocation0 [shape = 'u32[]', space=smem, size = 0x4, offset = 0x4, fixed_abs, tag = 'smem constant byte address 0x4 - core index']
  #allocation1 [shape = 'u32[72,128]{1,0:T(1,128)}', space=vmem, size = 0x9000, scoped, tag = 'internal scratch']
  #allocation2 [shape = 'f32[1,1]{1,0:T(1,128)S(6)}', space=smem, size = 0x200, scoped, tag = 'scoped memory for gae_forward.1']
  %s0 = inlined_call_operand.hbm [shape: f32[64,32,128], index: 0, kind: input, shape index: {}]
  %s1 = inlined_call_operand.hbm [shape: f32[64,32,128], index: 1, kind: input, shape index: {}]
  %s2 = inlined_call_operand.vmem [shape: f32[64,128], index: 2, kind: input, shape index: {}]
  %s3 = inlined_call_operand.vmem [shape: f32[64,128], index: 3, kind: input, shape index: {}]
  %s4 = inlined_call_operand.vmem [shape: f32[32,1], index: 4, kind: input, shape index: {}]
  %s5 = inlined_call_operand.<no memory space> [shape: f32[1,1], index: 5, kind: input, shape index: {}]
  %s6 = inlined_call_operand.hbm [shape: f32[128,128], index: 6, kind: input, shape index: {}]
  %s7 = inlined_call_operand.hbm [shape: f32[64,128], index: 7, kind: output, shape index: {}]
  %s8 = sld [smem:[#allocation0]]
  $region73: #{gae_forward.1} parent=0
    _
  %s10 = ssub.s32 1, %s8
  %s11 = scalar_select 0, %s10, %s8
  %12 = sst [smem:[#allocation2]] %s5
  $region1: #{gae_forward.1} parent=0
    #allocation3 [shape = 'u8[1048576]{0}', space=vmem, size = 0x100000, scoped, tag = 'input window, operand 0']
    #allocation4 [shape = 's32[2]{0}', space=sflag, size = 0x8, scoped, tag = 'scoped memory for gae_forward.1']
    #allocation5 [shape = 's32[2]{0}', space=sflag, size = 0x8, scoped, tag = 'scoped memory for gae_forward.1']
    #allocation6 [shape = 'u8[1048576]{0}', space=vmem, size = 0x100000, scoped, tag = 'input window, operand 1']
    #allocation7 [shape = 's32[2]{0}', space=sflag, size = 0x8, scoped, tag = 'scoped memory for gae_forward.1']
    #allocation8 [shape = 'u8[65536]{0}', space=vmem, size = 0x10000, scoped, tag = 'input window, operand 6, single buffered']
    #allocation9 [shape = 'u8[32768]{0}', space=vmem, size = 0x8000, scoped, tag = 'output window, operand 0']
    %13 = vsyncpa [#allocation4], 0
    %s14 = scalar_lea.sflag [#allocation4], 1
    %15 = vsyncpa %s14, 0
    %16 = vsyncpa [#allocation7], 0
    %s17 = scalar_lea.sflag [#allocation7], 1
    %18 = vsyncpa %s17, 0
    %19 = vsyncpa [#allocation5], 0
    %s20 = scalar_lea.sflag [#allocation5], 1
    %21 = vsyncpa %s20, 0
    loop: start=0, step=1, limit=4
    $region2: #{gae_forward.1} parent=1 // loop_pre_header
      _
    $region3: #{gae_forward.1} parent=1 // loop_header
      %s23 = sphi 0, %s27
      %p24 = scmp.ge.s32.totalorder %s23, 4
      %s33 = sphi 0, %s35
      %s36 = sphi 0, %s33
      %s37 = sphi 0, %s36
      %s53 = sphi 0, %s37
      %s59 = sphi 0, %s61
      %s62 = sphi 0, %s59
      %s63 = sphi 0, %s62
      %s79 = sphi 0, %s63
      %s85 = sphi 0, %s87
      %s88 = sphi 0, %s85
      %s89 = sphi 0, %s88
      %s105 = sphi 0, %s89
      %s111 = sphi 0, %s113
      %s114 = sphi 0, %s111
      %s115 = sphi 0, %s114
      %s131 = sphi 0, %s115
      %s135 = sphi 0, %s135
      %s137 = sphi 0, %s135
      %s138 = sphi 0, %s137
      %s152 = sphi 0, %s138
      %s156 = sphi 0, %s156
      %s158 = sphi 0, %s156
      %s159 = sphi 0, %s158
      %s173 = sphi 0, %s159
      %s177 = sphi 0, %s177
      %s179 = sphi 0, %s177
      %s180 = sphi 0, %s179
      %s194 = sphi 0, %s180
      %s200 = sphi 0, %s202
      %s203 = sphi 0, %s200
      %s204 = sphi 0, %s203
      %s220 = sphi 0, %s204
    $region4: #{gae_forward.1} parent=1 // loop_header_branch
      %26 = sbr.rel (%p24) target = $region8
    $region5: #{gae_forward.1} parent=1 // loop_body
      %s28 = ssub.s32 %s23, 1
      %s29 = ssub.s32 %s23, 2
      %s30 = sadd.s32 %s23, 1
      %s31 = ssub.s32 %s23, %s30
      %p32 = scmp.eq.s32.totalorder %s31, 0
      %s34 = sadd.s32 %s33, 1
      %s35 = scalar_select %p32, %s33, %s34
      %p38 = pneg %p32
      %p39 = scmp.eq.s32.totalorder %s23, 1
      %p40 = por %p38, %p39
      %p41 = scmp.ne.s32.totalorder %s33, %s36
      %p42 = scmp.eq.s32.totalorder %s23, 0
      %p43 = por %p41, %p42
      %p44 = scmp.ne.s32.totalorder %s33, %s36
      %p45 = scmp.eq.s32.totalorder %s28, 1
      %p46 = por %p44, %p45
      %p47 = scmp.ne.s32.totalorder %s36, %s37
      %p48 = scmp.eq.s32.totalorder %s28, 0
      %p49 = por %p47, %p48
      %p50 = scmp.ne.s32.totalorder %s36, %s37
      %p51 = scmp.eq.s32.totalorder %s29, 1
      %p52 = por %p50, %p51
      %p54 = scmp.ne.s32.totalorder %s37, %s53
      %p55 = scmp.eq.s32.totalorder %s29, 0
      %p56 = por %p54, %p55
      %s57 = ssub.s32 %s23, %s30
      %p58 = scmp.eq.s32.totalorder %s57, 0
      %s60 = sadd.s32 %s59, 1
      %s61 = scalar_select %p58, %s59, %s60
      %p64 = pneg %p58
      %p65 = scmp.eq.s32.totalorder %s23, 1
      %p66 = por %p64, %p65
      %p67 = scmp.ne.s32.totalorder %s59, %s62
      %p68 = scmp.eq.s32.totalorder %s23, 0
      %p69 = por %p67, %p68
      %p70 = scmp.ne.s32.totalorder %s59, %s62
      %p71 = scmp.eq.s32.totalorder %s28, 1
      %p72 = por %p70, %p71
      %p73 = scmp.ne.s32.totalorder %s62, %s63
      %p74 = scmp.eq.s32.totalorder %s28, 0
      %p75 = por %p73, %p74
      %p76 = scmp.ne.s32.totalorder %s62, %s63
      %p77 = scmp.eq.s32.totalorder %s29, 1
      %p78 = por %p76, %p77
      %p80 = scmp.ne.s32.totalorder %s63, %s79
      %p81 = scmp.eq.s32.totalorder %s29, 0
      %p82 = por %p80, %p81
      %s83 = ssub.s32 %s23, %s30
      %p84 = scmp.eq.s32.totalorder %s83, 0
      %s86 = sadd.s32 %s85, 1
      %s87 = scalar_select %p84, %s85, %s86
      %p90 = pneg %p84
      %p91 = scmp.eq.s32.totalorder %s23, 1
      %p92 = por %p90, %p91
      %p93 = scmp.ne.s32.totalorder %s85, %s88
      %p94 = scmp.eq.s32.totalorder %s23, 0
      %p95 = por %p93, %p94
      %p96 = scmp.ne.s32.totalorder %s85, %s88
      %p97 = scmp.eq.s32.totalorder %s28, 1
      %p98 = por %p96, %p97
      %p99 = scmp.ne.s32.totalorder %s88, %s89
      %p100 = scmp.eq.s32.totalorder %s28, 0
      %p101 = por %p99, %p100
      %p102 = scmp.ne.s32.totalorder %s88, %s89
      %p103 = scmp.eq.s32.totalorder %s29, 1
      %p104 = por %p102, %p103
      %p106 = scmp.ne.s32.totalorder %s89, %s105
      %p107 = scmp.eq.s32.totalorder %s29, 0
      %p108 = por %p106, %p107
      %s109 = ssub.s32 %s23, %s30
      %p110 = scmp.eq.s32.totalorder %s109, 0
      %s112 = sadd.s32 %s111, 1
      %s113 = scalar_select %p110, %s111, %s112
      %p116 = pneg %p110
      %p117 = scmp.eq.s32.totalorder %s23, 1
      %p118 = por %p116, %p117
      %p119 = scmp.ne.s32.totalorder %s111, %s114
      %p120 = scmp.eq.s32.totalorder %s23, 0
      %p121 = por %p119, %p120
      %p122 = scmp.ne.s32.totalorder %s111, %s114
      %p123 = scmp.eq.s32.totalorder %s28, 1
      %p124 = por %p122, %p123
      %p125 = scmp.ne.s32.totalorder %s114, %s115
      %p126 = scmp.eq.s32.totalorder %s28, 0
      %p127 = por %p125, %p126
      %p128 = scmp.ne.s32.totalorder %s114, %s115
      %p129 = scmp.eq.s32.totalorder %s29, 1
      %p130 = por %p128, %p129
      %p132 = scmp.ne.s32.totalorder %s115, %s131
      %p133 = scmp.eq.s32.totalorder %s29, 0
      %p134 = por %p132, %p133
      %s136 = sadd.s32 %s135, 1
      %p139 = scmp.eq.s32.totalorder %s23, 1
      %p140 = scmp.ne.s32.totalorder %s135, %s137
      %p141 = scmp.eq.s32.totalorder %s23, 0
      %p142 = por %p140, %p141
      %p143 = scmp.ne.s32.totalorder %s135, %s137
      %p144 = scmp.eq.s32.totalorder %s28, 1
      %p145 = por %p143, %p144
      %p146 = scmp.ne.s32.totalorder %s137, %s138
      %p147 = scmp.eq.s32.totalorder %s28, 0
      %p148 = por %p146, %p147
      %p149 = scmp.ne.s32.totalorder %s137, %s138
      %p150 = scmp.eq.s32.totalorder %s29, 1
      %p151 = por %p149, %p150
      %p153 = scmp.ne.s32.totalorder %s138, %s152
      %p154 = scmp.eq.s32.totalorder %s29, 0
      %p155 = por %p153, %p154
      %s157 = sadd.s32 %s156, 1
      %p160 = scmp.eq.s32.totalorder %s23, 1
      %p161 = scmp.ne.s32.totalorder %s156, %s158
      %p162 = scmp.eq.s32.totalorder %s23, 0
      %p163 = por %p161, %p162
      %p164 = scmp.ne.s32.totalorder %s156, %s158
      %p165 = scmp.eq.s32.totalorder %s28, 1
      %p166 = por %p164, %p165
      %p167 = scmp.ne.s32.totalorder %s158, %s159
      %p168 = scmp.eq.s32.totalorder %s28, 0
      %p169 = por %p167, %p168
      %p170 = scmp.ne.s32.totalorder %s158, %s159
      %p171 = scmp.eq.s32.totalorder %s29, 1
      %p172 = por %p170, %p171
      %p174 = scmp.ne.s32.totalorder %s159, %s173
      %p175 = scmp.eq.s32.totalorder %s29, 0
      %p176 = por %p174, %p175
      %s178 = sadd.s32 %s177, 1
      %p181 = scmp.eq.s32.totalorder %s23, 1
      %p182 = scmp.ne.s32.totalorder %s177, %s179
      %p183 = scmp.eq.s32.totalorder %s23, 0
      %p184 = por %p182, %p183
      %p185 = scmp.ne.s32.totalorder %s177, %s179
      %p186 = scmp.eq.s32.totalorder %s28, 1
      %p187 = por %p185, %p186
      %p188 = scmp.ne.s32.totalorder %s179, %s180
      %p189 = scmp.eq.s32.totalorder %s28, 0
      %p190 = por %p188, %p189
      %p191 = scmp.ne.s32.totalorder %s179, %s180
      %p192 = scmp.eq.s32.totalorder %s29, 1
      %p193 = por %p191, %p192
      %p195 = scmp.ne.s32.totalorder %s180, %s194
      %p196 = scmp.eq.s32.totalorder %s29, 0
      %p197 = por %p195, %p196
      %s198 = ssub.s32 %s23, %s30
      %p199 = scmp.eq.s32.totalorder %s198, 0
      %s201 = sadd.s32 %s200, 1
      %s202 = scalar_select %p199, %s200, %s201
      %p205 = pneg %p199
      %p206 = scmp.eq.s32.totalorder %s23, 1
      %p207 = por %p205, %p206
      %p208 = scmp.ne.s32.totalorder %s200, %s203
      %p209 = scmp.eq.s32.totalorder %s23, 0
      %p210 = por %p208, %p209
      %p211 = scmp.ne.s32.totalorder %s200, %s203
      %p212 = scmp.eq.s32.totalorder %s28, 1
      %p213 = por %p211, %p212
      %p214 = scmp.ne.s32.totalorder %s203, %s204
      %p215 = scmp.eq.s32.totalorder %s28, 0
      %p216 = por %p214, %p215
      %p217 = scmp.ne.s32.totalorder %s203, %s204
      %p218 = scmp.eq.s32.totalorder %s29, 1
      %p219 = por %p217, %p218
      %p221 = scmp.ne.s32.totalorder %s204, %s220
      %p222 = scmp.eq.s32.totalorder %s29, 0
      %p223 = por %p221, %p222
      %p224 = scmp.le.s32.totalorder 1, %s23
      %p225 = scmp.lt.s32.totalorder %s23, 3
      %p226 = pnand %p224, %p225
      %p227 = pneg %p226
      // Predicated region
      $region9: #{gae_forward.1} parent=5 // pred_check
        _
      $region10: #{gae_forward.1} parent=5 // pred_check_branch
        %229 = sbr.rel (%p226) target = $region12
      $region11: #{gae_forward.1} parent=5 // pred_region
        %s230 = ssub.s32 %s23, 1
        // Predicated region
        $region13: #{gae_forward.1} parent=11 // pred_check
          %p231 = pneg %p148
        $region14: #{gae_forward.1} parent=11 // pred_check_branch
          %233 = sbr.rel (%p231) target = $region16
        $region15: #{gae_forward.1} parent=11 // pred_region
          _
        $region16: #{gae_forward.1} parent=11 // pred_fallthru
          _
        // Predicated region
        $region17: #{gae_forward.1} parent=11 // pred_check
          %p234 = pneg %p169
        $region18: #{gae_forward.1} parent=11 // pred_check_branch
          %236 = sbr.rel (%p234) target = $region20
        $region19: #{gae_forward.1} parent=11 // pred_region
          _
        $region20: #{gae_forward.1} parent=11 // pred_fallthru
          _
        // Predicated region
        $region21: #{gae_forward.1} parent=11 // pred_check
          %p237 = pneg %p190
        $region22: #{gae_forward.1} parent=11 // pred_check_branch
          %239 = sbr.rel (%p237) target = $region24
        $region23: #{gae_forward.1} parent=11 // pred_region
          %241 = vsyncadd [#allocation7], 0
          %s242 = sshll.u32 %s6, 4
          %s243 = int_to_ptr.hbm [resolvable:$true] %s242
          %s244 = sshll.u32 [#allocation8], 4
          %s245 = int_to_ptr.vmem [resolvable:$true] %s244
          %250 = dma.hbm_to_vmem [thread:$0]  %s243, 2048, %s245, [#allocation7], 128, 128, 8
        $region24: #{gae_forward.1} parent=11 // pred_fallthru
          _
      $region12: #{gae_forward.1} parent=5 // pred_fallthru
        _
      %p251 = scmp.lt.s32.totalorder %s23, 2
      // Predicated region
      $region25: #{gae_forward.1} parent=5 // pred_check
        %p252 = pneg %p251
      $region26: #{gae_forward.1} parent=5 // pred_check_branch
        %254 = sbr.rel (%p252) target = $region28
      $region27: #{gae_forward.1} parent=5 // pred_region
        // Predicated region
        $region29: #{gae_forward.1} parent=27 // pred_check
          %p255 = pneg %p43
        $region30: #{gae_forward.1} parent=27 // pred_check_branch
          %257 = sbr.rel (%p255) target = $region32
        $region31: #{gae_forward.1} parent=27 // pred_region
          %s258 = sand.u32 %s33, 1
          %s259 = scalar_lea.sflag [#allocation4], %s258
          %s260 = sand.u32 %s33, 1
          %s261 = smul.addr %s260, 1024
          %s262 = scalar_lea.vmem [#allocation3], %s261
          %s263 = smul.u32 32, %s23
          %265 = vsyncadd %s259, 0
          %s266 = smul.addr %s263, 4
          %s267 = smul.addr %s266, 8
          %s268 = scalar_lea.hbm %s0, %s267
          %s269 = sshll.u32 %s268, 4
          %s270 = int_to_ptr.hbm [resolvable:$true] %s269
          %s271 = sshll.u32 %s262, 4
          %s272 = int_to_ptr.vmem [resolvable:$true] %s271
          %277 = dma.hbm_to_vmem [thread:$0]  %s270, 16384, %s272, %s259, 128, 128, 8
        $region32: #{gae_forward.1} parent=27 // pred_fallthru
          _
        // Predicated region
        $region33: #{gae_forward.1} parent=27 // pred_check
          %p278 = pneg %p69
        $region34: #{gae_forward.1} parent=27 // pred_check_branch
          %280 = sbr.rel (%p278) target = $region36
        $region35: #{gae_forward.1} parent=27 // pred_region
          %s281 = sand.u32 %s23, 1
          %s282 = scalar_lea.sflag [#allocation7], %s281
          %s283 = sand.u32 %s59, 1
          %s284 = smul.addr %s283, 1024
          %s285 = scalar_lea.vmem [#allocation6], %s284
          %s286 = smul.u32 32, %s23
          %288 = vsyncadd %s282, 0
          %s289 = smul.addr %s286, 4
          %s290 = smul.addr %s289, 8
          %s291 = scalar_lea.hbm %s1, %s290
          %s292 = sshll.u32 %s291, 4
          %s293 = int_to_ptr.hbm [resolvable:$true] %s292
          %s294 = sshll.u32 %s285, 4
          %s295 = int_to_ptr.vmem [resolvable:$true] %s294
          %300 = dma.hbm_to_vmem [thread:$0]  %s293, 16384, %s295, %s282, 128, 128, 8
        $region36: #{gae_forward.1} parent=27 // pred_fallthru
          _
        // Predicated region
        $region37: #{gae_forward.1} parent=27 // pred_check
          %p301 = pneg %p95
        $region38: #{gae_forward.1} parent=27 // pred_check_branch
          %303 = sbr.rel (%p301) target = $region40
        $region39: #{gae_forward.1} parent=27 // pred_region
          %s304 = smul.u32 4, %s23
          %p305 = scmp.lt.s32.totalorder %s304, 7
          %s306 = scalar_select %p305, %s304, 7
          %s307 = smul.addr %s306, 8
          %s308 = scalar_lea.vmem %s2, %s307
          %s309 = smul.u32 4, %s23
        $region40: #{gae_forward.1} parent=27 // pred_fallthru
          _
        // Predicated region
        $region41: #{gae_forward.1} parent=27 // pred_check
          %p310 = pneg %p121
        $region42: #{gae_forward.1} parent=27 // pred_check_branch
          %312 = sbr.rel (%p310) target = $region44
        $region43: #{gae_forward.1} parent=27 // pred_region
          %s313 = smul.u32 4, %s23
          %p314 = scmp.lt.s32.totalorder %s313, 7
          %s315 = scalar_select %p314, %s313, 7
          %s316 = smul.addr %s315, 8
          %s317 = scalar_lea.vmem %s3, %s316
          %s318 = smul.u32 4, %s23
        $region44: #{gae_forward.1} parent=27 // pred_fallthru
          _
      $region28: #{gae_forward.1} parent=5 // pred_fallthru
        _
      %p319 = scmp.le.s32.totalorder 1, %s23
      %p320 = scmp.lt.s32.totalorder %s23, 3
      %p321 = pnand %p319, %p320
      %p322 = pneg %p321
      // Predicated region
      $region45: #{gae_forward.1} parent=5 // pred_check
        _
      $region46: #{gae_forward.1} parent=5 // pred_check_branch
        %324 = sbr.rel (%p321) target = $region48
      $region47: #{gae_forward.1} parent=5 // pred_region
        %s325 = ssub.s32 %s23, 1
        %s326 = sand.u32 %s36, 1
        %s327 = scalar_lea.sflag [#allocation4], %s326
        %s328 = sand.u32 %s36, 1
        %s329 = smul.addr %s328, 1024
        %s330 = scalar_lea.vmem [#allocation3], %s329
        // Predicated region
        $region49: #{gae_forward.1} parent=47 // pred_check
          %p331 = pneg %p49
        $region50: #{gae_forward.1} parent=47 // pred_check_branch
          %333 = sbr.rel (%p331) target = $region52
        $region51: #{gae_forward.1} parent=47 // pred_region
          %335 = dma.done %s327, 16384
        $region52: #{gae_forward.1} parent=47 // pred_fallthru
          _
        %s336 = sand.u32 %s28, 1
        %s337 = scalar_lea.sflag [#allocation7], %s336
        %s338 = sand.u32 %s62, 1
        %s339 = smul.addr %s338, 1024
        %s340 = scalar_lea.vmem [#allocation6], %s339
        // Predicated region
        $region53: #{gae_forward.1} parent=47 // pred_check
          %p341 = pneg %p75
        $region54: #{gae_forward.1} parent=47 // pred_check_branch
          %343 = sbr.rel (%p341) target = $region56
        $region55: #{gae_forward.1} parent=47 // pred_region
          %345 = dma.done %s337, 16384
        $region56: #{gae_forward.1} parent=47 // pred_fallthru
          _
        // Predicated region
        $region57: #{gae_forward.1} parent=47 // pred_check
          %p346 = pneg %p190
        $region58: #{gae_forward.1} parent=47 // pred_check_branch
          %348 = sbr.rel (%p346) target = $region60
        $region59: #{gae_forward.1} parent=47 // pred_region
          %350 = dma.done [#allocation7], 2048
        $region60: #{gae_forward.1} parent=47 // pred_fallthru
          _
        %s351 = sand.u32 %s36, 1
        %s352 = scalar_lea.sflag [#allocation4], %s351
        %s353 = sand.u32 %s36, 1
        %s354 = smul.addr %s353, 1024
        %s355 = scalar_lea.vmem [#allocation3], %s354
        %p356 = pneg %p49
        %p357 = pneg %p46
        %s358 = sand.u32 %s28, 1
        %s359 = scalar_lea.sflag [#allocation7], %s358
        %s360 = sand.u32 %s62, 1
        %s361 = smul.addr %s360, 1024
        %s362 = scalar_lea.vmem [#allocation6], %s361
        %p363 = pneg %p75
        %p364 = pneg %p72
        %s365 = smul.u32 4, %s28
        %p366 = scmp.lt.s32.totalorder %s365, 7
        %s367 = scalar_select %p366, %s365, 7
        %s368 = smul.addr %s367, 8
        %s369 = scalar_lea.vmem %s2, %s368
        %p370 = pneg %p101
        %p371 = pneg %p98
        %s372 = smul.u32 4, %s28
        %p373 = scmp.lt.s32.totalorder %s372, 7
        %s374 = scalar_select %p373, %s372, 7
        %s375 = smul.addr %s374, 8
        %s376 = scalar_lea.vmem %s3, %s375
        %p377 = pneg %p127
        %p378 = pneg %p124
        %p379 = pneg %p148
        %p380 = pneg %p145
        %p381 = pneg %p169
        %p382 = pneg %p166
        %p383 = pneg %p190
        %p384 = pneg %p187
        %p385 = pneg %p216
        %p386 = pneg %p213
        %s387 = sand.u32 %s203, 1
        %s388 = scalar_lea.sflag [#allocation5], %s387
        %s389 = sand.u32 %s203, 1
        %s390 = smul.addr %s389, 32
        %s391 = scalar_lea.vmem [#allocation9], %s390
        %s392 = smul.u32 32, %s28
        %s393 = smul.u32 32, %s28
        %s394 = smul.u32 4, %s28
        %p395 = scmp.lt.s32.totalorder %s394, 7
        %s396 = scalar_select %p395, %s394, 7
        %s397 = smul.addr %s396, 8
        %s398 = scalar_lea.vmem %s2, %s397
        %s399 = smul.u32 4, %s28
        %s400 = smul.u32 4, %s28
        %p401 = scmp.lt.s32.totalorder %s400, 7
        %s402 = scalar_select %p401, %s400, 7
        %s403 = smul.addr %s402, 8
        %s404 = scalar_lea.vmem %s3, %s403
        %s405 = smul.u32 4, %s28
        %s406 = smul.u32 4, %s28
        %v407 = vld [vmem:[%s4] sm:$0xff]
        %v408 = vld [vmem:[%s4 + $0x8] sm:$0xff]
        %v409 = vld [vmem:[%s4 + $0x10] sm:$0xff]
        %v410 = vld [vmem:[%s4 + $0x18] sm:$0xff]
        %s411 = sld [smem:[#allocation2]]
        %v412 = vld [vmem:[%s330] sm:$0xff]
        %v413 = vld [vmem:[%s330 + $0x8] sm:$0xff]
        %v414 = vld [vmem:[%s330 + $0x10] sm:$0xff]
        %v415 = vld [vmem:[%s330 + $0x18] sm:$0xff]
        %v416 = vld [vmem:[%s330 + $0x20] sm:$0xff]
        %v417 = vld [vmem:[%s330 + $0x28] sm:$0xff]
        %v418 = vld [vmem:[%s330 + $0x30] sm:$0xff]
        %v419 = vld [vmem:[%s330 + $0x38] sm:$0xff]
        %v420 = vld [vmem:[%s330 + $0x40] sm:$0xff]
        %v421 = vld [vmem:[%s330 + $0x48] sm:$0xff]
        %v422 = vld [vmem:[%s330 + $0x50] sm:$0xff]
        %v423 = vld [vmem:[%s330 + $0x58] sm:$0xff]
        %v424 = vld [vmem:[%s330 + $0x60] sm:$0xff]
        %v425 = vld [vmem:[%s330 + $0x68] sm:$0xff]
        %v426 = vld [vmem:[%s330 + $0x70] sm:$0xff]
        %v427 = vld [vmem:[%s330 + $0x78] sm:$0xff]
        %v428 = vld [vmem:[%s330 + $0x80] sm:$0xff]
        %v429 = vld [vmem:[%s330 + $0x88] sm:$0xff]
        %v430 = vld [vmem:[%s330 + $0x90] sm:$0xff]
        %v431 = vld [vmem:[%s330 + $0x98] sm:$0xff]
        %v432 = vld [vmem:[%s330 + $0xa0] sm:$0xff]
        %v433 = vld [vmem:[%s330 + $0xa8] sm:$0xff]
        %v434 = vld [vmem:[%s330 + $0xb0] sm:$0xff]
        %v435 = vld [vmem:[%s330 + $0xb8] sm:$0xff]
        %v436 = vld [vmem:[%s330 + $0xc0] sm:$0xff]
        %v437 = vld [vmem:[%s330 + $0xc8] sm:$0xff]
        %v438 = vld [vmem:[%s330 + $0xd0] sm:$0xff]
        %v439 = vld [vmem:[%s330 + $0xd8] sm:$0xff]
        %v440 = vld [vmem:[%s330 + $0xe0] sm:$0xff]
        %v441 = vld [vmem:[%s330 + $0xe8] sm:$0xff]
        %v442 = vld [vmem:[%s330 + $0xf0] sm:$0xff]
        %v443 = vld [vmem:[%s330 + $0xf8] sm:$0xff]
        %v444 = vld [vmem:[%s330 + $0x100] sm:$0xff]
        %v445 = vld [vmem:[%s330 + $0x108] sm:$0xff]
        %v446 = vld [vmem:[%s330 + $0x110] sm:$0xff]
        %v447 = vld [vmem:[%s330 + $0x118] sm:$0xff]
        %v448 = vld [vmem:[%s330 + $0x120] sm:$0xff]
        %v449 = vld [vmem:[%s330 + $0x128] sm:$0xff]
        %v450 = vld [vmem:[%s330 + $0x130] sm:$0xff]
        %v451 = vld [vmem:[%s330 + $0x138] sm:$0xff]
        %v452 = vld [vmem:[%s330 + $0x140] sm:$0xff]
        %v453 = vld [vmem:[%s330 + $0x148] sm:$0xff]
        %v454 = vld [vmem:[%s330 + $0x150] sm:$0xff]
        %v455 = vld [vmem:[%s330 + $0x158] sm:$0xff]
        %v456 = vld [vmem:[%s330 + $0x160] sm:$0xff]
        %v457 = vld [vmem:[%s330 + $0x168] sm:$0xff]
        %v458 = vld [vmem:[%s330 + $0x170] sm:$0xff]
        %v459 = vld [vmem:[%s330 + $0x178] sm:$0xff]
        %v460 = vld [vmem:[%s330 + $0x180] sm:$0xff]
        %v461 = vld [vmem:[%s330 + $0x188] sm:$0xff]
        %v462 = vld [vmem:[%s330 + $0x190] sm:$0xff]
        %v463 = vld [vmem:[%s330 + $0x198] sm:$0xff]
        %v464 = vld [vmem:[%s330 + $0x1a0] sm:$0xff]
        %v465 = vld [vmem:[%s330 + $0x1a8] sm:$0xff]
        %v466 = vld [vmem:[%s330 + $0x1b0] sm:$0xff]
        %v467 = vld [vmem:[%s330 + $0x1b8] sm:$0xff]
        %v468 = vld [vmem:[%s330 + $0x1c0] sm:$0xff]
        %v469 = vld [vmem:[%s330 + $0x1c8] sm:$0xff]
        %v470 = vld [vmem:[%s330 + $0x1d0] sm:$0xff]
        %v471 = vld [vmem:[%s330 + $0x1d8] sm:$0xff]
        %v472 = vld [vmem:[%s330 + $0x1e0] sm:$0xff]
        %v473 = vld [vmem:[%s330 + $0x1e8] sm:$0xff]
        %v474 = vld [vmem:[%s330 + $0x1f0] sm:$0xff]
        %v475 = vld [vmem:[%s330 + $0x1f8] sm:$0xff]
        %v476 = vld [vmem:[%s330 + $0x200] sm:$0xff]
        %v477 = vld [vmem:[%s330 + $0x208] sm:$0xff]
        %v478 = vld [vmem:[%s330 + $0x210] sm:$0xff]
        %v479 = vld [vmem:[%s330 + $0x218] sm:$0xff]
        %v480 = vld [vmem:[%s330 + $0x220] sm:$0xff]
        %v481 = vld [vmem:[%s330 + $0x228] sm:$0xff]
        %v482 = vld [vmem:[%s330 + $0x230] sm:$0xff]
        %v483 = vld [vmem:[%s330 + $0x238] sm:$0xff]
        %v484 = vld [vmem:[%s330 + $0x240] sm:$0xff]
        %v485 = vld [vmem:[%s330 + $0x248] sm:$0xff]
        %v486 = vld [vmem:[%s330 + $0x250] sm:$0xff]
        %v487 = vld [vmem:[%s330 + $0x258] sm:$0xff]
        %v488 = vld [vmem:[%s330 + $0x260] sm:$0xff]
        %v489 = vld [vmem:[%s330 + $0x268] sm:$0xff]
        %v490 = vld [vmem:[%s330 + $0x270] sm:$0xff]
        %v491 = vld [vmem:[%s330 + $0x278] sm:$0xff]
        %v492 = vld [vmem:[%s330 + $0x280] sm:$0xff]
        %v493 = vld [vmem:[%s330 + $0x288] sm:$0xff]
        %v494 = vld [vmem:[%s330 + $0x290] sm:$0xff]
        %v495 = vld [vmem:[%s330 + $0x298] sm:$0xff]
        %v496 = vld [vmem:[%s330 + $0x2a0] sm:$0xff]
        %v497 = vld [vmem:[%s330 + $0x2a8] sm:$0xff]
        %v498 = vld [vmem:[%s330 + $0x2b0] sm:$0xff]
        %v499 = vld [vmem:[%s330 + $0x2b8] sm:$0xff]
        %v500 = vld [vmem:[%s330 + $0x2c0] sm:$0xff]
        %v501 = vld [vmem:[%s330 + $0x2c8] sm:$0xff]
        %v502 = vld [vmem:[%s330 + $0x2d0] sm:$0xff]
        %v503 = vld [vmem:[%s330 + $0x2d8] sm:$0xff]
        %v504 = vld [vmem:[%s330 + $0x2e0] sm:$0xff]
        %v505 = vld [vmem:[%s330 + $0x2e8] sm:$0xff]
        %v506 = vld [vmem:[%s330 + $0x2f0] sm:$0xff]
        %v507 = vld [vmem:[%s330 + $0x2f8] sm:$0xff]
        %v508 = vld [vmem:[%s330 + $0x300] sm:$0xff]
        %v509 = vld [vmem:[%s330 + $0x308] sm:$0xff]
        %v510 = vld [vmem:[%s330 + $0x310] sm:$0xff]
        %v511 = vld [vmem:[%s330 + $0x318] sm:$0xff]
        %v512 = vld [vmem:[%s330 + $0x320] sm:$0xff]
        %v513 = vld [vmem:[%s330 + $0x328] sm:$0xff]
        %v514 = vld [vmem:[%s330 + $0x330] sm:$0xff]
        %v515 = vld [vmem:[%s330 + $0x338] sm:$0xff]
        %v516 = vld [vmem:[%s330 + $0x340] sm:$0xff]
        %v517 = vld [vmem:[%s330 + $0x348] sm:$0xff]
        %v518 = vld [vmem:[%s330 + $0x350] sm:$0xff]
        %v519 = vld [vmem:[%s330 + $0x358] sm:$0xff]
        %v520 = vld [vmem:[%s330 + $0x360] sm:$0xff]
        %v521 = vld [vmem:[%s330 + $0x368] sm:$0xff]
        %v522 = vld [vmem:[%s330 + $0x370] sm:$0xff]
        %v523 = vld [vmem:[%s330 + $0x378] sm:$0xff]
        %v524 = vld [vmem:[%s330 + $0x380] sm:$0xff]
        %v525 = vld [vmem:[%s330 + $0x388] sm:$0xff]
        %v526 = vld [vmem:[%s330 + $0x390] sm:$0xff]
        %v527 = vld [vmem:[%s330 + $0x398] sm:$0xff]
        %v528 = vld [vmem:[%s330 + $0x3a0] sm:$0xff]
        %v529 = vld [vmem:[%s330 + $0x3a8] sm:$0xff]
        %v530 = vld [vmem:[%s330 + $0x3b0] sm:$0xff]
        %v531 = vld [vmem:[%s330 + $0x3b8] sm:$0xff]
        %v532 = vld [vmem:[%s330 + $0x3c0] sm:$0xff]
        %v533 = vld [vmem:[%s330 + $0x3c8] sm:$0xff]
        %v534 = vld [vmem:[%s330 + $0x3d0] sm:$0xff]
        %v535 = vld [vmem:[%s330 + $0x3d8] sm:$0xff]
        %v536 = vld [vmem:[%s330 + $0x3e0] sm:$0xff]
        %v537 = vld [vmem:[%s330 + $0x3e8] sm:$0xff]
        %v538 = vld [vmem:[%s330 + $0x3f0] sm:$0xff]
        %v539 = vld [vmem:[%s330 + $0x3f8] sm:$0xff]
        %541 = vset.pattern.permute.xlu0 0
        %542 = vperm.xlu0 %541, %v407
        %v543 = vpop.permute.xlu0 %542
        %546 = vset.pattern.permute.xlu0 0
        %547 = vperm.xlu0 %546, %v408
        %v548 = vpop.permute.xlu0 %547
        %551 = vset.pattern.permute.xlu0 0
        %552 = vperm.xlu0 %551, %v409
        %v553 = vpop.permute.xlu0 %552
        %556 = vset.pattern.permute.xlu0 0
        %557 = vperm.xlu0 %556, %v410
        %v558 = vpop.permute.xlu0 %557
        %v560 = vmul.f32 %v412, %v543
        %v561 = vmul.f32 %v413, %v548
        %v562 = vmul.f32 %v414, %v553
        %v563 = vmul.f32 %v415, %v558
        %v564 = vmul.f32 %v416, %v543
        %v565 = vmul.f32 %v417, %v548
        %v566 = vmul.f32 %v418, %v553
        %v567 = vmul.f32 %v419, %v558
        %v568 = vmul.f32 %v420, %v543
        %v569 = vmul.f32 %v421, %v548
        %v570 = vmul.f32 %v422, %v553
        %v571 = vmul.f32 %v423, %v558
        %v572 = vmul.f32 %v424, %v543
        %v573 = vmul.f32 %v425, %v548
        %v574 = vmul.f32 %v426, %v553
        %v575 = vmul.f32 %v427, %v558
        %v576 = vmul.f32 %v428, %v543
        %v577 = vmul.f32 %v429, %v548
        %v578 = vmul.f32 %v430, %v553
        %v579 = vmul.f32 %v431, %v558
        %v580 = vmul.f32 %v432, %v543
        %v581 = vmul.f32 %v433, %v548
        %v582 = vmul.f32 %v434, %v553
        %v583 = vmul.f32 %v435, %v558
        %v584 = vmul.f32 %v436, %v543
        %v585 = vmul.f32 %v437, %v548
        %v586 = vmul.f32 %v438, %v553
        %v587 = vmul.f32 %v439, %v558
        %v588 = vmul.f32 %v440, %v543
        %v589 = vmul.f32 %v441, %v548
        %v590 = vmul.f32 %v442, %v553
        %v591 = vmul.f32 %v443, %v558
        %v592 = vmul.f32 %v444, %v543
        %v593 = vmul.f32 %v445, %v548
        %v594 = vmul.f32 %v446, %v553
        %v595 = vmul.f32 %v447, %v558
        %v596 = vmul.f32 %v448, %v543
        %v597 = vmul.f32 %v449, %v548
        %v598 = vmul.f32 %v450, %v553
        %v599 = vmul.f32 %v451, %v558
        %v600 = vmul.f32 %v452, %v543
        %v601 = vmul.f32 %v453, %v548
        %v602 = vmul.f32 %v454, %v553
        %v603 = vmul.f32 %v455, %v558
        %v604 = vmul.f32 %v456, %v543
        %v605 = vmul.f32 %v457, %v548
        %v606 = vmul.f32 %v458, %v553
        %v607 = vmul.f32 %v459, %v558
        %v608 = vmul.f32 %v460, %v543
        %v609 = vmul.f32 %v461, %v548
        %v610 = vmul.f32 %v462, %v553
        %v611 = vmul.f32 %v463, %v558
        %v612 = vmul.f32 %v464, %v543
        %v613 = vmul.f32 %v465, %v548
        %v614 = vmul.f32 %v466, %v553
        %v615 = vmul.f32 %v467, %v558
        %v616 = vmul.f32 %v468, %v543
        %v617 = vmul.f32 %v469, %v548
        %v618 = vmul.f32 %v470, %v553
        %v619 = vmul.f32 %v471, %v558
        %v620 = vmul.f32 %v472, %v543
        %v621 = vmul.f32 %v473, %v548
        %v622 = vmul.f32 %v474, %v553
        %v623 = vmul.f32 %v475, %v558
        %v624 = vmul.f32 %v476, %v543
        %v625 = vmul.f32 %v477, %v548
        %v626 = vmul.f32 %v478, %v553
        %v627 = vmul.f32 %v479, %v558
        %v628 = vmul.f32 %v480, %v543
        %v629 = vmul.f32 %v481, %v548
        %v630 = vmul.f32 %v482, %v553
        %v631 = vmul.f32 %v483, %v558
        %v632 = vmul.f32 %v484, %v543
        %v633 = vmul.f32 %v485, %v548
        %v634 = vmul.f32 %v486, %v553
        %v635 = vmul.f32 %v487, %v558
        %v636 = vmul.f32 %v488, %v543
        %v637 = vmul.f32 %v489, %v548
        %v638 = vmul.f32 %v490, %v553
        %v639 = vmul.f32 %v491, %v558
        %v640 = vmul.f32 %v492, %v543
        %v641 = vmul.f32 %v493, %v548
        %v642 = vmul.f32 %v494, %v553
        %v643 = vmul.f32 %v495, %v558
        %v644 = vmul.f32 %v496, %v543
        %v645 = vmul.f32 %v497, %v548
        %v646 = vmul.f32 %v498, %v553
        %v647 = vmul.f32 %v499, %v558
        %v648 = vmul.f32 %v500, %v543
        %v649 = vmul.f32 %v501, %v548
        %v650 = vmul.f32 %v502, %v553
        %v651 = vmul.f32 %v503, %v558
        %v652 = vmul.f32 %v504, %v543
        %v653 = vmul.f32 %v505, %v548
        %v654 = vmul.f32 %v506, %v553
        %v655 = vmul.f32 %v507, %v558
        %v656 = vmul.f32 %v508, %v543
        %v657 = vmul.f32 %v509, %v548
        %v658 = vmul.f32 %v510, %v553
        %v659 = vmul.f32 %v511, %v558
        %v660 = vmul.f32 %v512, %v543
        %v661 = vmul.f32 %v513, %v548
        %v662 = vmul.f32 %v514, %v553
        %v663 = vmul.f32 %v515, %v558
        %v664 = vmul.f32 %v516, %v543
        %v665 = vmul.f32 %v517, %v548
        %v666 = vmul.f32 %v518, %v553
        %v667 = vmul.f32 %v519, %v558
        %v668 = vmul.f32 %v520, %v543
        %v669 = vmul.f32 %v521, %v548
        %v670 = vmul.f32 %v522, %v553
        %v671 = vmul.f32 %v523, %v558
        %v672 = vmul.f32 %v524, %v543
        %v673 = vmul.f32 %v525, %v548
        %v674 = vmul.f32 %v526, %v553
        %v675 = vmul.f32 %v527, %v558
        %v676 = vmul.f32 %v528, %v543
        %v677 = vmul.f32 %v529, %v548
        %v678 = vmul.f32 %v530, %v553
        %v679 = vmul.f32 %v531, %v558
        %v680 = vmul.f32 %v532, %v543
        %v681 = vmul.f32 %v533, %v548
        %v682 = vmul.f32 %v534, %v553
        %v683 = vmul.f32 %v535, %v558
        %v684 = vmul.f32 %v536, %v543
        %v685 = vmul.f32 %v537, %v548
        %v686 = vmul.f32 %v538, %v553
        %v687 = vmul.f32 %v539, %v558
        %v688 = vadd.f32 %v560, %v561
        %v689 = vadd.f32 %v688, %v562
        %v690 = vadd.f32 %v689, %v563
        %v691 = vrot.slane %v690, 4
        %v692 = vadd.f32 %v690, %v691
        %v693 = vrot.slane %v692, 2
        %v694 = vadd.f32 %v692, %v693
        %v695 = vrot.slane %v694, 1
        %v696 = vadd.f32 %v694, %v695
        %v697 = vadd.f32 %v564, %v565
        %v698 = vadd.f32 %v697, %v566
        %v699 = vadd.f32 %v698, %v567
        %v700 = vrot.slane %v699, 4
        %v701 = vadd.f32 %v699, %v700
        %v702 = vrot.slane %v701, 2
        %v703 = vadd.f32 %v701, %v702
        %v704 = vrot.slane %v703, 1
        %v705 = vadd.f32 %v703, %v704
        %v706 = vadd.f32 %v568, %v569
        %v707 = vadd.f32 %v706, %v570
        %v708 = vadd.f32 %v707, %v571
        %v709 = vrot.slane %v708, 4
        %v710 = vadd.f32 %v708, %v709
        %v711 = vrot.slane %v710, 2
        %v712 = vadd.f32 %v710, %v711
        %v713 = vrot.slane %v712, 1
        %v714 = vadd.f32 %v712, %v713
        %v715 = vadd.f32 %v572, %v573
        %v716 = vadd.f32 %v715, %v574
        %v717 = vadd.f32 %v716, %v575
        %v718 = vrot.slane %v717, 4
        %v719 = vadd.f32 %v717, %v718
        %v720 = vrot.slane %v719, 2
        %v721 = vadd.f32 %v719, %v720
        %v722 = vrot.slane %v721, 1
        %v723 = vadd.f32 %v721, %v722
        %v724 = vadd.f32 %v576, %v577
        %v725 = vadd.f32 %v724, %v578
        %v726 = vadd.f32 %v725, %v579
        %v727 = vrot.slane %v726, 4
        %v728 = vadd.f32 %v726, %v727
        %v729 = vrot.slane %v728, 2
        %v730 = vadd.f32 %v728, %v729
        %v731 = vrot.slane %v730, 1
        %v732 = vadd.f32 %v730, %v731
        %v733 = vadd.f32 %v580, %v581
        %v734 = vadd.f32 %v733, %v582
        %v735 = vadd.f32 %v734, %v583
        %v736 = vrot.slane %v735, 4
        %v737 = vadd.f32 %v735, %v736
        %v738 = vrot.slane %v737, 2
        %v739 = vadd.f32 %v737, %v738
        %v740 = vrot.slane %v739, 1
        %v741 = vadd.f32 %v739, %v740
        %v742 = vadd.f32 %v584, %v585
        %v743 = vadd.f32 %v742, %v586
        %v744 = vadd.f32 %v743, %v587
        %v745 = vrot.slane %v744, 4
        %v746 = vadd.f32 %v744, %v745
        %v747 = vrot.slane %v746, 2
        %v748 = vadd.f32 %v746, %v747
        %v749 = vrot.slane %v748, 1
        %v750 = vadd.f32 %v748, %v749
        %v751 = vadd.f32 %v588, %v589
        %v752 = vadd.f32 %v751, %v590
        %v753 = vadd.f32 %v752, %v591
        %v754 = vrot.slane %v753, 4
        %v755 = vadd.f32 %v753, %v754
        %v756 = vrot.slane %v755, 2
        %v757 = vadd.f32 %v755, %v756
        %v758 = vrot.slane %v757, 1
        %v759 = vadd.f32 %v757, %v758
        %v760 = vadd.f32 %v592, %v593
        %v761 = vadd.f32 %v760, %v594
        %v762 = vadd.f32 %v761, %v595
        %v763 = vrot.slane %v762, 4
        %v764 = vadd.f32 %v762, %v763
        %v765 = vrot.slane %v764, 2
        %v766 = vadd.f32 %v764, %v765
        %v767 = vrot.slane %v766, 1
        %v768 = vadd.f32 %v766, %v767
        %v769 = vadd.f32 %v596, %v597
        %v770 = vadd.f32 %v769, %v598
        %v771 = vadd.f32 %v770, %v599
        %v772 = vrot.slane %v771, 4
        %v773 = vadd.f32 %v771, %v772
        %v774 = vrot.slane %v773, 2
        %v775 = vadd.f32 %v773, %v774
        %v776 = vrot.slane %v775, 1
        %v777 = vadd.f32 %v775, %v776
        %v778 = vadd.f32 %v600, %v601
        %v779 = vadd.f32 %v778, %v602
        %v780 = vadd.f32 %v779, %v603
        %v781 = vrot.slane %v780, 4
        %v782 = vadd.f32 %v780, %v781
        %v783 = vrot.slane %v782, 2
        %v784 = vadd.f32 %v782, %v783
        %v785 = vrot.slane %v784, 1
        %v786 = vadd.f32 %v784, %v785
        %v787 = vadd.f32 %v604, %v605
        %v788 = vadd.f32 %v787, %v606
        %v789 = vadd.f32 %v788, %v607
        %v790 = vrot.slane %v789, 4
        %v791 = vadd.f32 %v789, %v790
        %v792 = vrot.slane %v791, 2
        %v793 = vadd.f32 %v791, %v792
        %v794 = vrot.slane %v793, 1
        %v795 = vadd.f32 %v793, %v794
        %v796 = vadd.f32 %v608, %v609
        %v797 = vadd.f32 %v796, %v610
        %v798 = vadd.f32 %v797, %v611
        %v799 = vrot.slane %v798, 4
        %v800 = vadd.f32 %v798, %v799
        %v801 = vrot.slane %v800, 2
        %v802 = vadd.f32 %v800, %v801
        %v803 = vrot.slane %v802, 1
        %v804 = vadd.f32 %v802, %v803
        %v805 = vadd.f32 %v612, %v613
        %v806 = vadd.f32 %v805, %v614
        %v807 = vadd.f32 %v806, %v615
        %v808 = vrot.slane %v807, 4
        %v809 = vadd.f32 %v807, %v808
        %v810 = vrot.slane %v809, 2
        %v811 = vadd.f32 %v809, %v810
        %v812 = vrot.slane %v811, 1
        %v813 = vadd.f32 %v811, %v812
        %v814 = vadd.f32 %v616, %v617
        %v815 = vadd.f32 %v814, %v618
        %v816 = vadd.f32 %v815, %v619
        %v817 = vrot.slane %v816, 4
        %v818 = vadd.f32 %v816, %v817
        %v819 = vrot.slane %v818, 2
        %v820 = vadd.f32 %v818, %v819
        %v821 = vrot.slane %v820, 1
        %v822 = vadd.f32 %v820, %v821
        %v823 = vadd.f32 %v620, %v621
        %v824 = vadd.f32 %v823, %v622
        %v825 = vadd.f32 %v824, %v623
        %v826 = vrot.slane %v825, 4
        %v827 = vadd.f32 %v825, %v826
        %v828 = vrot.slane %v827, 2
        %v829 = vadd.f32 %v827, %v828
        %v830 = vrot.slane %v829, 1
        %v831 = vadd.f32 %v829, %v830
        %v832 = vadd.f32 %v624, %v625
        %v833 = vadd.f32 %v832, %v626
        %v834 = vadd.f32 %v833, %v627
        %v835 = vrot.slane %v834, 4
        %v836 = vadd.f32 %v834, %v835
        %v837 = vrot.slane %v836, 2
        %v838 = vadd.f32 %v836, %v837
        %v839 = vrot.slane %v838, 1
        %v840 = vadd.f32 %v838, %v839
        %v841 = vadd.f32 %v628, %v629
        %v842 = vadd.f32 %v841, %v630
        %v843 = vadd.f32 %v842, %v631
        %v844 = vrot.slane %v843, 4
        %v845 = vadd.f32 %v843, %v844
        %v846 = vrot.slane %v845, 2
        %v847 = vadd.f32 %v845, %v846
        %v848 = vrot.slane %v847, 1
        %v849 = vadd.f32 %v847, %v848
        %v850 = vadd.f32 %v632, %v633
        %v851 = vadd.f32 %v850, %v634
        %v852 = vadd.f32 %v851, %v635
        %v853 = vrot.slane %v852, 4
        %v854 = vadd.f32 %v852, %v853
        %v855 = vrot.slane %v854, 2
        %v856 = vadd.f32 %v854, %v855
        %v857 = vrot.slane %v856, 1
        %v858 = vadd.f32 %v856, %v857
        %v859 = vadd.f32 %v636, %v637
        %v860 = vadd.f32 %v859, %v638
        %v861 = vadd.f32 %v860, %v639
        %v862 = vrot.slane %v861, 4
        %v863 = vadd.f32 %v861, %v862
        %v864 = vrot.slane %v863, 2
        %v865 = vadd.f32 %v863, %v864
        %v866 = vrot.slane %v865, 1
        %v867 = vadd.f32 %v865, %v866
        %v868 = vadd.f32 %v640, %v641
        %v869 = vadd.f32 %v868, %v642
        %v870 = vadd.f32 %v869, %v643
        %v871 = vrot.slane %v870, 4
        %v872 = vadd.f32 %v870, %v871
        %v873 = vrot.slane %v872, 2
        %v874 = vadd.f32 %v872, %v873
        %v875 = vrot.slane %v874, 1
        %v876 = vadd.f32 %v874, %v875
        %v877 = vadd.f32 %v644, %v645
        %v878 = vadd.f32 %v877, %v646
        %v879 = vadd.f32 %v878, %v647
        %v880 = vrot.slane %v879, 4
        %v881 = vadd.f32 %v879, %v880
        %v882 = vrot.slane %v881, 2
        %v883 = vadd.f32 %v881, %v882
        %v884 = vrot.slane %v883, 1
        %v885 = vadd.f32 %v883, %v884
        %v886 = vadd.f32 %v648, %v649
        %v887 = vadd.f32 %v886, %v650
        %v888 = vadd.f32 %v887, %v651
        %v889 = vrot.slane %v888, 4
        %v890 = vadd.f32 %v888, %v889
        %v891 = vrot.slane %v890, 2
        %v892 = vadd.f32 %v890, %v891
        %v893 = vrot.slane %v892, 1
        %v894 = vadd.f32 %v892, %v893
        %v895 = vadd.f32 %v652, %v653
        %v896 = vadd.f32 %v895, %v654
        %v897 = vadd.f32 %v896, %v655
        %v898 = vrot.slane %v897, 4
        %v899 = vadd.f32 %v897, %v898
        %v900 = vrot.slane %v899, 2
        %v901 = vadd.f32 %v899, %v900
        %v902 = vrot.slane %v901, 1
        %v903 = vadd.f32 %v901, %v902
        %v904 = vadd.f32 %v656, %v657
        %v905 = vadd.f32 %v904, %v658
        %v906 = vadd.f32 %v905, %v659
        %v907 = vrot.slane %v906, 4
        %v908 = vadd.f32 %v906, %v907
        %v909 = vrot.slane %v908, 2
        %v910 = vadd.f32 %v908, %v909
        %v911 = vrot.slane %v910, 1
        %v912 = vadd.f32 %v910, %v911
        %v913 = vadd.f32 %v660, %v661
        %v914 = vadd.f32 %v913, %v662
        %v915 = vadd.f32 %v914, %v663
        %v916 = vrot.slane %v915, 4
        %v917 = vadd.f32 %v915, %v916
        %v918 = vrot.slane %v917, 2
        %v919 = vadd.f32 %v917, %v918
        %v920 = vrot.slane %v919, 1
        %v921 = vadd.f32 %v919, %v920
        %v922 = vadd.f32 %v664, %v665
        %v923 = vadd.f32 %v922, %v666
        %v924 = vadd.f32 %v923, %v667
        %v925 = vrot.slane %v924, 4
        %v926 = vadd.f32 %v924, %v925
        %v927 = vrot.slane %v926, 2
        %v928 = vadd.f32 %v926, %v927
        %v929 = vrot.slane %v928, 1
        %v930 = vadd.f32 %v928, %v929
        %v931 = vadd.f32 %v668, %v669
        %v932 = vadd.f32 %v931, %v670
        %v933 = vadd.f32 %v932, %v671
        %v934 = vrot.slane %v933, 4
        %v935 = vadd.f32 %v933, %v934
        %v936 = vrot.slane %v935, 2
        %v937 = vadd.f32 %v935, %v936
        %v938 = vrot.slane %v937, 1
        %v939 = vadd.f32 %v937, %v938
        %v940 = vadd.f32 %v672, %v673
        %v941 = vadd.f32 %v940, %v674
        %v942 = vadd.f32 %v941, %v675
        %v943 = vrot.slane %v942, 4
        %v944 = vadd.f32 %v942, %v943
        %v945 = vrot.slane %v944, 2
        %v946 = vadd.f32 %v944, %v945
        %v947 = vrot.slane %v946, 1
        %v948 = vadd.f32 %v946, %v947
        %v949 = vadd.f32 %v676, %v677
        %v950 = vadd.f32 %v949, %v678
        %v951 = vadd.f32 %v950, %v679
        %v952 = vrot.slane %v951, 4
        %v953 = vadd.f32 %v951, %v952
        %v954 = vrot.slane %v953, 2
        %v955 = vadd.f32 %v953, %v954
        %v956 = vrot.slane %v955, 1
        %v957 = vadd.f32 %v955, %v956
        %v958 = vadd.f32 %v680, %v681
        %v959 = vadd.f32 %v958, %v682
        %v960 = vadd.f32 %v959, %v683
        %v961 = vrot.slane %v960, 4
        %v962 = vadd.f32 %v960, %v961
        %v963 = vrot.slane %v962, 2
        %v964 = vadd.f32 %v962, %v963
        %v965 = vrot.slane %v964, 1
        %v966 = vadd.f32 %v964, %v965
        %v967 = vadd.f32 %v684, %v685
        %v968 = vadd.f32 %v967, %v686
        %v969 = vadd.f32 %v968, %v687
        %v970 = vrot.slane %v969, 4
        %v971 = vadd.f32 %v969, %v970
        %v972 = vrot.slane %v971, 2
        %v973 = vadd.f32 %v971, %v972
        %v974 = vrot.slane %v973, 1
        %v975 = vadd.f32 %v973, %v974
        %v976 = vld [vmem:[%s340] sm:$0xff]
        %v977 = vld [vmem:[%s340 + $0x8] sm:$0xff]
        %v978 = vld [vmem:[%s340 + $0x10] sm:$0xff]
        %v979 = vld [vmem:[%s340 + $0x18] sm:$0xff]
        %v980 = vld [vmem:[%s340 + $0x20] sm:$0xff]
        %v981 = vld [vmem:[%s340 + $0x28] sm:$0xff]
        %v982 = vld [vmem:[%s340 + $0x30] sm:$0xff]
        %v983 = vld [vmem:[%s340 + $0x38] sm:$0xff]
        %v984 = vld [vmem:[%s340 + $0x40] sm:$0xff]
        %v985 = vld [vmem:[%s340 + $0x48] sm:$0xff]
        %v986 = vld [vmem:[%s340 + $0x50] sm:$0xff]
        %v987 = vld [vmem:[%s340 + $0x58] sm:$0xff]
        %v988 = vld [vmem:[%s340 + $0x60] sm:$0xff]
        %v989 = vld [vmem:[%s340 + $0x68] sm:$0xff]
        %v990 = vld [vmem:[%s340 + $0x70] sm:$0xff]
        %v991 = vld [vmem:[%s340 + $0x78] sm:$0xff]
        %v992 = vld [vmem:[%s340 + $0x80] sm:$0xff]
        %v993 = vld [vmem:[%s340 + $0x88] sm:$0xff]
        %v994 = vld [vmem:[%s340 + $0x90] sm:$0xff]
        %v995 = vld [vmem:[%s340 + $0x98] sm:$0xff]
        %v996 = vld [vmem:[%s340 + $0xa0] sm:$0xff]
        %v997 = vld [vmem:[%s340 + $0xa8] sm:$0xff]
        %v998 = vld [vmem:[%s340 + $0xb0] sm:$0xff]
        %v999 = vld [vmem:[%s340 + $0xb8] sm:$0xff]
        %v1000 = vld [vmem:[%s340 + $0xc0] sm:$0xff]
        %v1001 = vld [vmem:[%s340 + $0xc8] sm:$0xff]
        %v1002 = vld [vmem:[%s340 + $0xd0] sm:$0xff]
        %v1003 = vld [vmem:[%s340 + $0xd8] sm:$0xff]
        %v1004 = vld [vmem:[%s340 + $0xe0] sm:$0xff]
        %v1005 = vld [vmem:[%s340 + $0xe8] sm:$0xff]
        %v1006 = vld [vmem:[%s340 + $0xf0] sm:$0xff]
        %v1007 = vld [vmem:[%s340 + $0xf8] sm:$0xff]
        %v1008 = vld [vmem:[%s340 + $0x100] sm:$0xff]
        %v1009 = vld [vmem:[%s340 + $0x108] sm:$0xff]
        %v1010 = vld [vmem:[%s340 + $0x110] sm:$0xff]
        %v1011 = vld [vmem:[%s340 + $0x118] sm:$0xff]
        %v1012 = vld [vmem:[%s340 + $0x120] sm:$0xff]
        %v1013 = vld [vmem:[%s340 + $0x128] sm:$0xff]
        %v1014 = vld [vmem:[%s340 + $0x130] sm:$0xff]
        %v1015 = vld [vmem:[%s340 + $0x138] sm:$0xff]
        %v1016 = vld [vmem:[%s340 + $0x140] sm:$0xff]
        %v1017 = vld [vmem:[%s340 + $0x148] sm:$0xff]
        %v1018 = vld [vmem:[%s340 + $0x150] sm:$0xff]
        %v1019 = vld [vmem:[%s340 + $0x158] sm:$0xff]
        %v1020 = vld [vmem:[%s340 + $0x160] sm:$0xff]
        %v1021 = vld [vmem:[%s340 + $0x168] sm:$0xff]
        %v1022 = vld [vmem:[%s340 + $0x170] sm:$0xff]
        %v1023 = vld [vmem:[%s340 + $0x178] sm:$0xff]
        %v1024 = vld [vmem:[%s340 + $0x180] sm:$0xff]
        %v1025 = vld [vmem:[%s340 + $0x188] sm:$0xff]
        %v1026 = vld [vmem:[%s340 + $0x190] sm:$0xff]
        %v1027 = vld [vmem:[%s340 + $0x198] sm:$0xff]
        %v1028 = vld [vmem:[%s340 + $0x1a0] sm:$0xff]
        %v1029 = vld [vmem:[%s340 + $0x1a8] sm:$0xff]
        %v1030 = vld [vmem:[%s340 + $0x1b0] sm:$0xff]
        %v1031 = vld [vmem:[%s340 + $0x1b8] sm:$0xff]
        %v1032 = vld [vmem:[%s340 + $0x1c0] sm:$0xff]
        %v1033 = vld [vmem:[%s340 + $0x1c8] sm:$0xff]
        %v1034 = vld [vmem:[%s340 + $0x1d0] sm:$0xff]
        %v1035 = vld [vmem:[%s340 + $0x1d8] sm:$0xff]
        %v1036 = vld [vmem:[%s340 + $0x1e0] sm:$0xff]
        %v1037 = vld [vmem:[%s340 + $0x1e8] sm:$0xff]
        %v1038 = vld [vmem:[%s340 + $0x1f0] sm:$0xff]
        %v1039 = vld [vmem:[%s340 + $0x1f8] sm:$0xff]
        %v1040 = vld [vmem:[%s340 + $0x200] sm:$0xff]
        %v1041 = vld [vmem:[%s340 + $0x208] sm:$0xff]
        %v1042 = vld [vmem:[%s340 + $0x210] sm:$0xff]
        %v1043 = vld [vmem:[%s340 + $0x218] sm:$0xff]
        %v1044 = vld [vmem:[%s340 + $0x220] sm:$0xff]
        %v1045 = vld [vmem:[%s340 + $0x228] sm:$0xff]
        %v1046 = vld [vmem:[%s340 + $0x230] sm:$0xff]
        %v1047 = vld [vmem:[%s340 + $0x238] sm:$0xff]
        %v1048 = vld [vmem:[%s340 + $0x240] sm:$0xff]
        %v1049 = vld [vmem:[%s340 + $0x248] sm:$0xff]
        %v1050 = vld [vmem:[%s340 + $0x250] sm:$0xff]
        %v1051 = vld [vmem:[%s340 + $0x258] sm:$0xff]
        %v1052 = vld [vmem:[%s340 + $0x260] sm:$0xff]
        %v1053 = vld [vmem:[%s340 + $0x268] sm:$0xff]
        %v1054 = vld [vmem:[%s340 + $0x270] sm:$0xff]
        %v1055 = vld [vmem:[%s340 + $0x278] sm:$0xff]
        %v1056 = vld [vmem:[%s340 + $0x280] sm:$0xff]
        %v1057 = vld [vmem:[%s340 + $0x288] sm:$0xff]
        %v1058 = vld [vmem:[%s340 + $0x290] sm:$0xff]
        %v1059 = vld [vmem:[%s340 + $0x298] sm:$0xff]
        %v1060 = vld [vmem:[%s340 + $0x2a0] sm:$0xff]
        %v1061 = vld [vmem:[%s340 + $0x2a8] sm:$0xff]
        %v1062 = vld [vmem:[%s340 + $0x2b0] sm:$0xff]
        %v1063 = vld [vmem:[%s340 + $0x2b8] sm:$0xff]
        %v1064 = vld [vmem:[%s340 + $0x2c0] sm:$0xff]
        %v1065 = vld [vmem:[%s340 + $0x2c8] sm:$0xff]
        %v1066 = vld [vmem:[%s340 + $0x2d0] sm:$0xff]
        %v1067 = vld [vmem:[%s340 + $0x2d8] sm:$0xff]
        %v1068 = vld [vmem:[%s340 + $0x2e0] sm:$0xff]
        %v1069 = vld [vmem:[%s340 + $0x2e8] sm:$0xff]
        %v1070 = vld [vmem:[%s340 + $0x2f0] sm:$0xff]
        %v1071 = vld [vmem:[%s340 + $0x2f8] sm:$0xff]
        %v1072 = vld [vmem:[%s340 + $0x300] sm:$0xff]
        %v1073 = vld [vmem:[%s340 + $0x308] sm:$0xff]
        %v1074 = vld [vmem:[%s340 + $0x310] sm:$0xff]
        %v1075 = vld [vmem:[%s340 + $0x318] sm:$0xff]
        %v1076 = vld [vmem:[%s340 + $0x320] sm:$0xff]
        %v1077 = vld [vmem:[%s340 + $0x328] sm:$0xff]
        %v1078 = vld [vmem:[%s340 + $0x330] sm:$0xff]
        %v1079 = vld [vmem:[%s340 + $0x338] sm:$0xff]
        %v1080 = vld [vmem:[%s340 + $0x340] sm:$0xff]
        %v1081 = vld [vmem:[%s340 + $0x348] sm:$0xff]
        %v1082 = vld [vmem:[%s340 + $0x350] sm:$0xff]
        %v1083 = vld [vmem:[%s340 + $0x358] sm:$0xff]
        %v1084 = vld [vmem:[%s340 + $0x360] sm:$0xff]
        %v1085 = vld [vmem:[%s340 + $0x368] sm:$0xff]
        %v1086 = vld [vmem:[%s340 + $0x370] sm:$0xff]
        %v1087 = vld [vmem:[%s340 + $0x378] sm:$0xff]
        %v1088 = vld [vmem:[%s340 + $0x380] sm:$0xff]
        %v1089 = vld [vmem:[%s340 + $0x388] sm:$0xff]
        %v1090 = vld [vmem:[%s340 + $0x390] sm:$0xff]
        %v1091 = vld [vmem:[%s340 + $0x398] sm:$0xff]
        %v1092 = vld [vmem:[%s340 + $0x3a0] sm:$0xff]
        %v1093 = vld [vmem:[%s340 + $0x3a8] sm:$0xff]
        %v1094 = vld [vmem:[%s340 + $0x3b0] sm:$0xff]
        %v1095 = vld [vmem:[%s340 + $0x3b8] sm:$0xff]
        %v1096 = vld [vmem:[%s340 + $0x3c0] sm:$0xff]
        %v1097 = vld [vmem:[%s340 + $0x3c8] sm:$0xff]
        %v1098 = vld [vmem:[%s340 + $0x3d0] sm:$0xff]
        %v1099 = vld [vmem:[%s340 + $0x3d8] sm:$0xff]
        %v1100 = vld [vmem:[%s340 + $0x3e0] sm:$0xff]
        %v1101 = vld [vmem:[%s340 + $0x3e8] sm:$0xff]
        %v1102 = vld [vmem:[%s340 + $0x3f0] sm:$0xff]
        %v1103 = vld [vmem:[%s340 + $0x3f8] sm:$0xff]
        %v1104 = vmul.f32 %v976, %v543
        %v1105 = vmul.f32 %v977, %v548
        %v1106 = vmul.f32 %v978, %v553
        %v1107 = vmul.f32 %v979, %v558
        %v1108 = vmul.f32 %v980, %v543
        %v1109 = vmul.f32 %v981, %v548
        %v1110 = vmul.f32 %v982, %v553
        %v1111 = vmul.f32 %v983, %v558
        %v1112 = vmul.f32 %v984, %v543
        %v1113 = vmul.f32 %v985, %v548
        %v1114 = vmul.f32 %v986, %v553
        %v1115 = vmul.f32 %v987, %v558
        %v1116 = vmul.f32 %v988, %v543
        %v1117 = vmul.f32 %v989, %v548
        %v1118 = vmul.f32 %v990, %v553
        %v1119 = vmul.f32 %v991, %v558
        %v1120 = vmul.f32 %v992, %v543
        %v1121 = vmul.f32 %v993, %v548
        %v1122 = vmul.f32 %v994, %v553
        %v1123 = vmul.f32 %v995, %v558
        %v1124 = vmul.f32 %v996, %v543
        %v1125 = vmul.f32 %v997, %v548
        %v1126 = vmul.f32 %v998, %v553
        %v1127 = vmul.f32 %v999, %v558
        %v1128 = vmul.f32 %v1000, %v543
        %v1129 = vmul.f32 %v1001, %v548
        %v1130 = vmul.f32 %v1002, %v553
        %v1131 = vmul.f32 %v1003, %v558
        %v1132 = vmul.f32 %v1004, %v543
        %v1133 = vmul.f32 %v1005, %v548
        %v1134 = vmul.f32 %v1006, %v553
        %v1135 = vmul.f32 %v1007, %v558
        %v1136 = vmul.f32 %v1008, %v543
        %v1137 = vmul.f32 %v1009, %v548
        %v1138 = vmul.f32 %v1010, %v553
        %v1139 = vmul.f32 %v1011, %v558
        %v1140 = vmul.f32 %v1012, %v543
        %v1141 = vmul.f32 %v1013, %v548
        %v1142 = vmul.f32 %v1014, %v553
        %v1143 = vmul.f32 %v1015, %v558
        %v1144 = vmul.f32 %v1016, %v543
        %v1145 = vmul.f32 %v1017, %v548
        %v1146 = vmul.f32 %v1018, %v553
        %v1147 = vmul.f32 %v1019, %v558
        %v1148 = vmul.f32 %v1020, %v543
        %v1149 = vmul.f32 %v1021, %v548
        %v1150 = vmul.f32 %v1022, %v553
        %v1151 = vmul.f32 %v1023, %v558
        %v1152 = vmul.f32 %v1024, %v543
        %v1153 = vmul.f32 %v1025, %v548
        %v1154 = vmul.f32 %v1026, %v553
        %v1155 = vmul.f32 %v1027, %v558
        %v1156 = vmul.f32 %v1028, %v543
        %v1157 = vmul.f32 %v1029, %v548
        %v1158 = vmul.f32 %v1030, %v553
        %v1159 = vmul.f32 %v1031, %v558
        %v1160 = vmul.f32 %v1032, %v543
        %v1161 = vmul.f32 %v1033, %v548
        %v1162 = vmul.f32 %v1034, %v553
        %v1163 = vmul.f32 %v1035, %v558
        %v1164 = vmul.f32 %v1036, %v543
        %v1165 = vmul.f32 %v1037, %v548
        %v1166 = vmul.f32 %v1038, %v553
        %v1167 = vmul.f32 %v1039, %v558
        %v1168 = vmul.f32 %v1040, %v543
        %v1169 = vmul.f32 %v1041, %v548
        %v1170 = vmul.f32 %v1042, %v553
        %v1171 = vmul.f32 %v1043, %v558
        %v1172 = vmul.f32 %v1044, %v543
        %v1173 = vmul.f32 %v1045, %v548
        %v1174 = vmul.f32 %v1046, %v553
        %v1175 = vmul.f32 %v1047, %v558
        %v1176 = vmul.f32 %v1048, %v543
        %v1177 = vmul.f32 %v1049, %v548
        %v1178 = vmul.f32 %v1050, %v553
        %v1179 = vmul.f32 %v1051, %v558
        %v1180 = vmul.f32 %v1052, %v543
        %v1181 = vmul.f32 %v1053, %v548
        %v1182 = vmul.f32 %v1054, %v553
        %v1183 = vmul.f32 %v1055, %v558
        %v1184 = vmul.f32 %v1056, %v543
        %v1185 = vmul.f32 %v1057, %v548
        %v1186 = vmul.f32 %v1058, %v553
        %v1187 = vmul.f32 %v1059, %v558
        %v1188 = vmul.f32 %v1060, %v543
        %v1189 = vmul.f32 %v1061, %v548
        %v1190 = vmul.f32 %v1062, %v553
        %v1191 = vmul.f32 %v1063, %v558
        %v1192 = vmul.f32 %v1064, %v543
        %v1193 = vmul.f32 %v1065, %v548
        %v1194 = vmul.f32 %v1066, %v553
        %v1195 = vmul.f32 %v1067, %v558
        %v1196 = vmul.f32 %v1068, %v543
        %v1197 = vmul.f32 %v1069, %v548
        %v1198 = vmul.f32 %v1070, %v553
        %v1199 = vmul.f32 %v1071, %v558
        %v1200 = vmul.f32 %v1072, %v543
        %v1201 = vmul.f32 %v1073, %v548
        %v1202 = vmul.f32 %v1074, %v553
        %v1203 = vmul.f32 %v1075, %v558
        %v1204 = vmul.f32 %v1076, %v543
        %v1205 = vmul.f32 %v1077, %v548
        %v1206 = vmul.f32 %v1078, %v553
        %v1207 = vmul.f32 %v1079, %v558
        %v1208 = vmul.f32 %v1080, %v543
        %v1209 = vmul.f32 %v1081, %v548
        %v1210 = vmul.f32 %v1082, %v553
        %v1211 = vmul.f32 %v1083, %v558
        %v1212 = vmul.f32 %v1084, %v543
        %v1213 = vmul.f32 %v1085, %v548
        %v1214 = vmul.f32 %v1086, %v553
        %v1215 = vmul.f32 %v1087, %v558
        %v1216 = vmul.f32 %v1088, %v543
        %v1217 = vmul.f32 %v1089, %v548
        %v1218 = vmul.f32 %v1090, %v553
        %v1219 = vmul.f32 %v1091, %v558
        %v1220 = vmul.f32 %v1092, %v543
        %v1221 = vmul.f32 %v1093, %v548
        %v1222 = vmul.f32 %v1094, %v553
        %v1223 = vmul.f32 %v1095, %v558
        %v1224 = vmul.f32 %v1096, %v543
        %v1225 = vmul.f32 %v1097, %v548
        %v1226 = vmul.f32 %v1098, %v553
        %v1227 = vmul.f32 %v1099, %v558
        %v1228 = vmul.f32 %v1100, %v543
        %v1229 = vmul.f32 %v1101, %v548
        %v1230 = vmul.f32 %v1102, %v553
        %v1231 = vmul.f32 %v1103, %v558
        %v1232 = vadd.f32 %v1104, %v1105
        %v1233 = vadd.f32 %v1232, %v1106
        %v1234 = vadd.f32 %v1233, %v1107
        %v1235 = vrot.slane %v1234, 4
        %v1236 = vadd.f32 %v1234, %v1235
        %v1237 = vrot.slane %v1236, 2
        %v1238 = vadd.f32 %v1236, %v1237
        %v1239 = vrot.slane %v1238, 1
        %v1240 = vadd.f32 %v1238, %v1239
        %v1241 = vadd.f32 %v1108, %v1109
        %v1242 = vadd.f32 %v1241, %v1110
        %v1243 = vadd.f32 %v1242, %v1111
        %v1244 = vrot.slane %v1243, 4
        %v1245 = vadd.f32 %v1243, %v1244
        %v1246 = vrot.slane %v1245, 2
        %v1247 = vadd.f32 %v1245, %v1246
        %v1248 = vrot.slane %v1247, 1
        %v1249 = vadd.f32 %v1247, %v1248
        %v1250 = vadd.f32 %v1112, %v1113
        %v1251 = vadd.f32 %v1250, %v1114
        %v1252 = vadd.f32 %v1251, %v1115
        %v1253 = vrot.slane %v1252, 4
        %v1254 = vadd.f32 %v1252, %v1253
        %v1255 = vrot.slane %v1254, 2
        %v1256 = vadd.f32 %v1254, %v1255
        %v1257 = vrot.slane %v1256, 1
        %v1258 = vadd.f32 %v1256, %v1257
        %v1259 = vadd.f32 %v1116, %v1117
        %v1260 = vadd.f32 %v1259, %v1118
        %v1261 = vadd.f32 %v1260, %v1119
        %v1262 = vrot.slane %v1261, 4
        %v1263 = vadd.f32 %v1261, %v1262
        %v1264 = vrot.slane %v1263, 2
        %v1265 = vadd.f32 %v1263, %v1264
        %v1266 = vrot.slane %v1265, 1
        %v1267 = vadd.f32 %v1265, %v1266
        %v1268 = vadd.f32 %v1120, %v1121
        %v1269 = vadd.f32 %v1268, %v1122
        %v1270 = vadd.f32 %v1269, %v1123
        %v1271 = vrot.slane %v1270, 4
        %v1272 = vadd.f32 %v1270, %v1271
        %v1273 = vrot.slane %v1272, 2
        %v1274 = vadd.f32 %v1272, %v1273
        %v1275 = vrot.slane %v1274, 1
        %v1276 = vadd.f32 %v1274, %v1275
        %v1277 = vadd.f32 %v1124, %v1125
        %v1278 = vadd.f32 %v1277, %v1126
        %v1279 = vadd.f32 %v1278, %v1127
        %v1280 = vrot.slane %v1279, 4
        %v1281 = vadd.f32 %v1279, %v1280
        %v1282 = vrot.slane %v1281, 2
        %v1283 = vadd.f32 %v1281, %v1282
        %v1284 = vrot.slane %v1283, 1
        %v1285 = vadd.f32 %v1283, %v1284
        %v1286 = vadd.f32 %v1128, %v1129
        %v1287 = vadd.f32 %v1286, %v1130
        %v1288 = vadd.f32 %v1287, %v1131
        %v1289 = vrot.slane %v1288, 4
        %v1290 = vadd.f32 %v1288, %v1289
        %v1291 = vrot.slane %v1290, 2
        %v1292 = vadd.f32 %v1290, %v1291
        %v1293 = vrot.slane %v1292, 1
        %v1294 = vadd.f32 %v1292, %v1293
        %v1295 = vadd.f32 %v1132, %v1133
        %v1296 = vadd.f32 %v1295, %v1134
        %v1297 = vadd.f32 %v1296, %v1135
        %v1298 = vrot.slane %v1297, 4
        %v1299 = vadd.f32 %v1297, %v1298
        %v1300 = vrot.slane %v1299, 2
        %v1301 = vadd.f32 %v1299, %v1300
        %v1302 = vrot.slane %v1301, 1
        %v1303 = vadd.f32 %v1301, %v1302
        %v1304 = vadd.f32 %v1136, %v1137
        %v1305 = vadd.f32 %v1304, %v1138
        %v1306 = vadd.f32 %v1305, %v1139
        %v1307 = vrot.slane %v1306, 4
        %v1308 = vadd.f32 %v1306, %v1307
        %v1309 = vrot.slane %v1308, 2
        %v1310 = vadd.f32 %v1308, %v1309
        %v1311 = vrot.slane %v1310, 1
        %v1312 = vadd.f32 %v1310, %v1311
        %v1313 = vadd.f32 %v1140, %v1141
        %v1314 = vadd.f32 %v1313, %v1142
        %v1315 = vadd.f32 %v1314, %v1143
        %v1316 = vrot.slane %v1315, 4
        %v1317 = vadd.f32 %v1315, %v1316
        %v1318 = vrot.slane %v1317, 2
        %v1319 = vadd.f32 %v1317, %v1318
        %v1320 = vrot.slane %v1319, 1
        %v1321 = vadd.f32 %v1319, %v1320
        %v1322 = vadd.f32 %v1144, %v1145
        %v1323 = vadd.f32 %v1322, %v1146
        %v1324 = vadd.f32 %v1323, %v1147
        %v1325 = vrot.slane %v1324, 4
        %v1326 = vadd.f32 %v1324, %v1325
        %v1327 = vrot.slane %v1326, 2
        %v1328 = vadd.f32 %v1326, %v1327
        %v1329 = vrot.slane %v1328, 1
        %v1330 = vadd.f32 %v1328, %v1329
        %v1331 = vadd.f32 %v1148, %v1149
        %v1332 = vadd.f32 %v1331, %v1150
        %v1333 = vadd.f32 %v1332, %v1151
        %v1334 = vrot.slane %v1333, 4
        %v1335 = vadd.f32 %v1333, %v1334
        %v1336 = vrot.slane %v1335, 2
        %v1337 = vadd.f32 %v1335, %v1336
        %v1338 = vrot.slane %v1337, 1
        %v1339 = vadd.f32 %v1337, %v1338
        %v1340 = vadd.f32 %v1152, %v1153
        %v1341 = vadd.f32 %v1340, %v1154
        %v1342 = vadd.f32 %v1341, %v1155
        %v1343 = vrot.slane %v1342, 4
        %v1344 = vadd.f32 %v1342, %v1343
        %v1345 = vrot.slane %v1344, 2
        %v1346 = vadd.f32 %v1344, %v1345
        %v1347 = vrot.slane %v1346, 1
        %v1348 = vadd.f32 %v1346, %v1347
        %v1349 = vadd.f32 %v1156, %v1157
        %v1350 = vadd.f32 %v1349, %v1158
        %v1351 = vadd.f32 %v1350, %v1159
        %v1352 = vrot.slane %v1351, 4
        %v1353 = vadd.f32 %v1351, %v1352
        %v1354 = vrot.slane %v1353, 2
        %v1355 = vadd.f32 %v1353, %v1354
        %v1356 = vrot.slane %v1355, 1
        %v1357 = vadd.f32 %v1355, %v1356
        %v1358 = vadd.f32 %v1160, %v1161
        %v1359 = vadd.f32 %v1358, %v1162
        %v1360 = vadd.f32 %v1359, %v1163
        %v1361 = vrot.slane %v1360, 4
        %v1362 = vadd.f32 %v1360, %v1361
        %v1363 = vrot.slane %v1362, 2
        %v1364 = vadd.f32 %v1362, %v1363
        %v1365 = vrot.slane %v1364, 1
        %v1366 = vadd.f32 %v1364, %v1365
        %v1367 = vadd.f32 %v1164, %v1165
        %v1368 = vadd.f32 %v1367, %v1166
        %v1369 = vadd.f32 %v1368, %v1167
        %v1370 = vrot.slane %v1369, 4
        %v1371 = vadd.f32 %v1369, %v1370
        %v1372 = vrot.slane %v1371, 2
        %v1373 = vadd.f32 %v1371, %v1372
        %v1374 = vrot.slane %v1373, 1
        %v1375 = vadd.f32 %v1373, %v1374
        %v1376 = vadd.f32 %v1168, %v1169
        %v1377 = vadd.f32 %v1376, %v1170
        %v1378 = vadd.f32 %v1377, %v1171
        %v1379 = vrot.slane %v1378, 4
        %v1380 = vadd.f32 %v1378, %v1379
        %v1381 = vrot.slane %v1380, 2
        %v1382 = vadd.f32 %v1380, %v1381
        %v1383 = vrot.slane %v1382, 1
        %v1384 = vadd.f32 %v1382, %v1383
        %v1385 = vadd.f32 %v1172, %v1173
        %v1386 = vadd.f32 %v1385, %v1174
        %v1387 = vadd.f32 %v1386, %v1175
        %v1388 = vrot.slane %v1387, 4
        %v1389 = vadd.f32 %v1387, %v1388
        %v1390 = vrot.slane %v1389, 2
        %v1391 = vadd.f32 %v1389, %v1390
        %v1392 = vrot.slane %v1391, 1
        %v1393 = vadd.f32 %v1391, %v1392
        %v1394 = vadd.f32 %v1176, %v1177
        %v1395 = vadd.f32 %v1394, %v1178
        %v1396 = vadd.f32 %v1395, %v1179
        %v1397 = vrot.slane %v1396, 4
        %v1398 = vadd.f32 %v1396, %v1397
        %v1399 = vrot.slane %v1398, 2
        %v1400 = vadd.f32 %v1398, %v1399
        %v1401 = vrot.slane %v1400, 1
        %v1402 = vadd.f32 %v1400, %v1401
        %v1403 = vadd.f32 %v1180, %v1181
        %v1404 = vadd.f32 %v1403, %v1182
        %v1405 = vadd.f32 %v1404, %v1183
        %v1406 = vrot.slane %v1405, 4
        %v1407 = vadd.f32 %v1405, %v1406
        %v1408 = vrot.slane %v1407, 2
        %v1409 = vadd.f32 %v1407, %v1408
        %v1410 = vrot.slane %v1409, 1
        %v1411 = vadd.f32 %v1409, %v1410
        %v1412 = vadd.f32 %v1184, %v1185
        %v1413 = vadd.f32 %v1412, %v1186
        %v1414 = vadd.f32 %v1413, %v1187
        %v1415 = vrot.slane %v1414, 4
        %v1416 = vadd.f32 %v1414, %v1415
        %v1417 = vrot.slane %v1416, 2
        %v1418 = vadd.f32 %v1416, %v1417
        %v1419 = vrot.slane %v1418, 1
        %v1420 = vadd.f32 %v1418, %v1419
        %v1421 = vadd.f32 %v1188, %v1189
        %v1422 = vadd.f32 %v1421, %v1190
        %v1423 = vadd.f32 %v1422, %v1191
        %v1424 = vrot.slane %v1423, 4
        %v1425 = vadd.f32 %v1423, %v1424
        %v1426 = vrot.slane %v1425, 2
        %v1427 = vadd.f32 %v1425, %v1426
        %v1428 = vrot.slane %v1427, 1
        %v1429 = vadd.f32 %v1427, %v1428
        %v1430 = vadd.f32 %v1192, %v1193
        %v1431 = vadd.f32 %v1430, %v1194
        %v1432 = vadd.f32 %v1431, %v1195
        %v1433 = vrot.slane %v1432, 4
        %v1434 = vadd.f32 %v1432, %v1433
        %v1435 = vrot.slane %v1434, 2
        %v1436 = vadd.f32 %v1434, %v1435
        %v1437 = vrot.slane %v1436, 1
        %v1438 = vadd.f32 %v1436, %v1437
        %v1439 = vadd.f32 %v1196, %v1197
        %v1440 = vadd.f32 %v1439, %v1198
        %v1441 = vadd.f32 %v1440, %v1199
        %v1442 = vrot.slane %v1441, 4
        %v1443 = vadd.f32 %v1441, %v1442
        %v1444 = vrot.slane %v1443, 2
        %v1445 = vadd.f32 %v1443, %v1444
        %v1446 = vrot.slane %v1445, 1
        %v1447 = vadd.f32 %v1445, %v1446
        %v1448 = vadd.f32 %v1200, %v1201
        %v1449 = vadd.f32 %v1448, %v1202
        %v1450 = vadd.f32 %v1449, %v1203
        %v1451 = vrot.slane %v1450, 4
        %v1452 = vadd.f32 %v1450, %v1451
        %v1453 = vrot.slane %v1452, 2
        %v1454 = vadd.f32 %v1452, %v1453
        %v1455 = vrot.slane %v1454, 1
        %v1456 = vadd.f32 %v1454, %v1455
        %v1457 = vadd.f32 %v1204, %v1205
        %v1458 = vadd.f32 %v1457, %v1206
        %v1459 = vadd.f32 %v1458, %v1207
        %v1460 = vrot.slane %v1459, 4
        %v1461 = vadd.f32 %v1459, %v1460
        %v1462 = vrot.slane %v1461, 2
        %v1463 = vadd.f32 %v1461, %v1462
        %v1464 = vrot.slane %v1463, 1
        %v1465 = vadd.f32 %v1463, %v1464
        %v1466 = vadd.f32 %v1208, %v1209
        %v1467 = vadd.f32 %v1466, %v1210
        %v1468 = vadd.f32 %v1467, %v1211
        %v1469 = vrot.slane %v1468, 4
        %v1470 = vadd.f32 %v1468, %v1469
        %v1471 = vrot.slane %v1470, 2
        %v1472 = vadd.f32 %v1470, %v1471
        %v1473 = vrot.slane %v1472, 1
        %v1474 = vadd.f32 %v1472, %v1473
        %v1475 = vadd.f32 %v1212, %v1213
        %v1476 = vadd.f32 %v1475, %v1214
        %v1477 = vadd.f32 %v1476, %v1215
        %v1478 = vrot.slane %v1477, 4
        %v1479 = vadd.f32 %v1477, %v1478
        %v1480 = vrot.slane %v1479, 2
        %v1481 = vadd.f32 %v1479, %v1480
        %v1482 = vrot.slane %v1481, 1
        %v1483 = vadd.f32 %v1481, %v1482
        %v1484 = vadd.f32 %v1216, %v1217
        %v1485 = vadd.f32 %v1484, %v1218
        %v1486 = vadd.f32 %v1485, %v1219
        %v1487 = vrot.slane %v1486, 4
        %v1488 = vadd.f32 %v1486, %v1487
        %v1489 = vrot.slane %v1488, 2
        %v1490 = vadd.f32 %v1488, %v1489
        %v1491 = vrot.slane %v1490, 1
        %v1492 = vadd.f32 %v1490, %v1491
        %v1493 = vadd.f32 %v1220, %v1221
        %v1494 = vadd.f32 %v1493, %v1222
        %v1495 = vadd.f32 %v1494, %v1223
        %v1496 = vrot.slane %v1495, 4
        %v1497 = vadd.f32 %v1495, %v1496
        %v1498 = vrot.slane %v1497, 2
        %v1499 = vadd.f32 %v1497, %v1498
        %v1500 = vrot.slane %v1499, 1
        %v1501 = vadd.f32 %v1499, %v1500
        %v1502 = vadd.f32 %v1224, %v1225
        %v1503 = vadd.f32 %v1502, %v1226
        %v1504 = vadd.f32 %v1503, %v1227
        %v1505 = vrot.slane %v1504, 4
        %v1506 = vadd.f32 %v1504, %v1505
        %v1507 = vrot.slane %v1506, 2
        %v1508 = vadd.f32 %v1506, %v1507
        %v1509 = vrot.slane %v1508, 1
        %v1510 = vadd.f32 %v1508, %v1509
        %v1511 = vadd.f32 %v1228, %v1229
        %v1512 = vadd.f32 %v1511, %v1230
        %v1513 = vadd.f32 %v1512, %v1231
        %v1514 = vrot.slane %v1513, 4
        %v1515 = vadd.f32 %v1513, %v1514
        %v1516 = vrot.slane %v1515, 2
        %v1517 = vadd.f32 %v1515, %v1516
        %v1518 = vrot.slane %v1517, 1
        %v1519 = vadd.f32 %v1517, %v1518
        %v1520 = vld [vmem:[%s404] sm:$0xff]
        %v1521 = vld [vmem:[%s404 + $0x8] sm:$0xff]
        %v1522 = vld [vmem:[%s404 + $0x10] sm:$0xff]
        %v1523 = vld [vmem:[%s404 + $0x18] sm:$0xff]
        %v1524 = vld [vmem:[%s398] sm:$0xff]
        %v1525 = vld [vmem:[%s398 + $0x8] sm:$0xff]
        %v1526 = vld [vmem:[%s398 + $0x10] sm:$0xff]
        %v1527 = vld [vmem:[%s398 + $0x18] sm:$0xff]
        %v1528 = vstv %s411
        %v1529 = vadd.f32 %v1240, %v1528
        %v1530 = vadd.f32 %v1249, %v1528
        %v1531 = vadd.f32 %v1258, %v1528
        %v1532 = vadd.f32 %v1267, %v1528
        %v1533 = vadd.f32 %v1276, %v1528
        %v1534 = vadd.f32 %v1285, %v1528
        %v1535 = vadd.f32 %v1294, %v1528
        %v1536 = vadd.f32 %v1303, %v1528
        %v1537 = vadd.f32 %v1312, %v1528
        %v1538 = vadd.f32 %v1321, %v1528
        %v1539 = vadd.f32 %v1330, %v1528
        %v1540 = vadd.f32 %v1339, %v1528
        %v1541 = vadd.f32 %v1348, %v1528
        %v1542 = vadd.f32 %v1357, %v1528
        %v1543 = vadd.f32 %v1366, %v1528
        %v1544 = vadd.f32 %v1375, %v1528
        %v1545 = vadd.f32 %v1384, %v1528
        %v1546 = vadd.f32 %v1393, %v1528
        %v1547 = vadd.f32 %v1402, %v1528
        %v1548 = vadd.f32 %v1411, %v1528
        %v1549 = vadd.f32 %v1420, %v1528
        %v1550 = vadd.f32 %v1429, %v1528
        %v1551 = vadd.f32 %v1438, %v1528
        %v1552 = vadd.f32 %v1447, %v1528
        %v1553 = vadd.f32 %v1456, %v1528
        %v1554 = vadd.f32 %v1465, %v1528
        %v1555 = vadd.f32 %v1474, %v1528
        %v1556 = vadd.f32 %v1483, %v1528
        %v1557 = vadd.f32 %v1492, %v1528
        %v1558 = vadd.f32 %v1501, %v1528
        %v1559 = vadd.f32 %v1510, %v1528
        %v1560 = vadd.f32 %v1519, %v1528
        %vm1593 = vcmask 1041409
        %v1594 = vsel %vm1593, %v1530, %v1529
        %vm1595 = vcmask 1042434
        %v1596 = vsel %vm1595, %v1531, %v1594
        %vm1597 = vcmask 1043459
        %v1598 = vsel %vm1597, %v1532, %v1596
        %vm1599 = vcmask 1044484
        %v1600 = vsel %vm1599, %v1533, %v1598
        %vm1601 = vcmask 1045509
        %v1602 = vsel %vm1601, %v1534, %v1600
        %vm1603 = vcmask 1046534
        %v1604 = vsel %vm1603, %v1535, %v1602
        %vm1605 = vcmask 1047559
        %v1606 = vsel %vm1605, %v1536, %v1604
        %v1607 = vsel %vm1593, %v1538, %v1537
        %v1608 = vsel %vm1595, %v1539, %v1607
        %v1609 = vsel %vm1597, %v1540, %v1608
        %v1610 = vsel %vm1599, %v1541, %v1609
        %v1611 = vsel %vm1601, %v1542, %v1610
        %v1612 = vsel %vm1603, %v1543, %v1611
        %v1613 = vsel %vm1605, %v1544, %v1612
        %v1614 = vsel %vm1593, %v1546, %v1545
        %v1615 = vsel %vm1595, %v1547, %v1614
        %v1616 = vsel %vm1597, %v1548, %v1615
        %v1617 = vsel %vm1599, %v1549, %v1616
        %v1618 = vsel %vm1601, %v1550, %v1617
        %v1619 = vsel %vm1603, %v1551, %v1618
        %v1620 = vsel %vm1605, %v1552, %v1619
        %v1621 = vsel %vm1593, %v1554, %v1553
        %v1622 = vsel %vm1595, %v1555, %v1621
        %v1623 = vsel %vm1597, %v1556, %v1622
        %v1624 = vsel %vm1599, %v1557, %v1623
        %v1625 = vsel %vm1601, %v1558, %v1624
        %v1626 = vsel %vm1603, %v1559, %v1625
        %v1627 = vsel %vm1605, %v1560, %v1626
        %v1632 = vmul.f32 %v1520, %v1606
        %v1633 = vmul.f32 %v1521, %v1613
        %v1634 = vmul.f32 %v1522, %v1620
        %v1635 = vmul.f32 %v1523, %v1627
        %v1636 = vadd.f32 %v1524, %v1632
        %v1637 = vadd.f32 %v1525, %v1633
        %v1638 = vadd.f32 %v1526, %v1634
        %v1639 = vadd.f32 %v1527, %v1635
        %v1640 = vadd.f32 %v696, %v1528
        %v1641 = vadd.f32 %v705, %v1528
        %v1642 = vadd.f32 %v714, %v1528
        %v1643 = vadd.f32 %v723, %v1528
        %v1644 = vadd.f32 %v732, %v1528
        %v1645 = vadd.f32 %v741, %v1528
        %v1646 = vadd.f32 %v750, %v1528
        %v1647 = vadd.f32 %v759, %v1528
        %v1648 = vadd.f32 %v768, %v1528
        %v1649 = vadd.f32 %v777, %v1528
        %v1650 = vadd.f32 %v786, %v1528
        %v1651 = vadd.f32 %v795, %v1528
        %v1652 = vadd.f32 %v804, %v1528
        %v1653 = vadd.f32 %v813, %v1528
        %v1654 = vadd.f32 %v822, %v1528
        %v1655 = vadd.f32 %v831, %v1528
        %v1656 = vadd.f32 %v840, %v1528
        %v1657 = vadd.f32 %v849, %v1528
        %v1658 = vadd.f32 %v858, %v1528
        %v1659 = vadd.f32 %v867, %v1528
        %v1660 = vadd.f32 %v876, %v1528
        %v1661 = vadd.f32 %v885, %v1528
        %v1662 = vadd.f32 %v894, %v1528
        %v1663 = vadd.f32 %v903, %v1528
        %v1664 = vadd.f32 %v912, %v1528
        %v1665 = vadd.f32 %v921, %v1528
        %v1666 = vadd.f32 %v930, %v1528
        %v1667 = vadd.f32 %v939, %v1528
        %v1668 = vadd.f32 %v948, %v1528
        %v1669 = vadd.f32 %v957, %v1528
        %v1670 = vadd.f32 %v966, %v1528
        %v1671 = vadd.f32 %v975, %v1528
        %v1704 = vsel %vm1593, %v1641, %v1640
        %v1705 = vsel %vm1595, %v1642, %v1704
        %v1706 = vsel %vm1597, %v1643, %v1705
        %v1707 = vsel %vm1599, %v1644, %v1706
        %v1708 = vsel %vm1601, %v1645, %v1707
        %v1709 = vsel %vm1603, %v1646, %v1708
        %v1710 = vsel %vm1605, %v1647, %v1709
        %v1711 = vsel %vm1593, %v1649, %v1648
        %v1712 = vsel %vm1595, %v1650, %v1711
        %v1713 = vsel %vm1597, %v1651, %v1712
        %v1714 = vsel %vm1599, %v1652, %v1713
        %v1715 = vsel %vm1601, %v1653, %v1714
        %v1716 = vsel %vm1603, %v1654, %v1715
        %v1717 = vsel %vm1605, %v1655, %v1716
        %v1718 = vsel %vm1593, %v1657, %v1656
        %v1719 = vsel %vm1595, %v1658, %v1718
        %v1720 = vsel %vm1597, %v1659, %v1719
        %v1721 = vsel %vm1599, %v1660, %v1720
        %v1722 = vsel %vm1601, %v1661, %v1721
        %v1723 = vsel %vm1603, %v1662, %v1722
        %v1724 = vsel %vm1605, %v1663, %v1723
        %v1725 = vsel %vm1593, %v1665, %v1664
        %v1726 = vsel %vm1595, %v1666, %v1725
        %v1727 = vsel %vm1597, %v1667, %v1726
        %v1728 = vsel %vm1599, %v1668, %v1727
        %v1729 = vsel %vm1601, %v1669, %v1728
        %v1730 = vsel %vm1603, %v1670, %v1729
        %v1731 = vsel %vm1605, %v1671, %v1730
        %v1736 = vsub.f32 %v1636, %v1710
        %v1737 = vsub.f32 %v1637, %v1717
        %v1738 = vsub.f32 %v1638, %v1724
        %v1739 = vsub.f32 %v1639, %v1731
        %v1740 = vld [vmem:[#allocation8] sm:$0xff]
        %v1741 = vld [vmem:[#allocation8 + $0x8] sm:$0xff]
        %v1742 = vld [vmem:[#allocation8 + $0x10] sm:$0xff]
        %v1743 = vld [vmem:[#allocation8 + $0x18] sm:$0xff]
        %v1744 = vld [vmem:[#allocation8 + $0x20] sm:$0xff]
        %v1745 = vld [vmem:[#allocation8 + $0x28] sm:$0xff]
        %v1746 = vld [vmem:[#allocation8 + $0x30] sm:$0xff]
        %v1747 = vld [vmem:[#allocation8 + $0x38] sm:$0xff]
        %v1748 = vld [vmem:[#allocation8 + $0x40] sm:$0xff]
        %v1749 = vld [vmem:[#allocation8 + $0x48] sm:$0xff]
        %v1750 = vld [vmem:[#allocation8 + $0x50] sm:$0xff]
        %v1751 = vld [vmem:[#allocation8 + $0x58] sm:$0xff]
        %v1752 = vld [vmem:[#allocation8 + $0x60] sm:$0xff]
        %v1753 = vld [vmem:[#allocation8 + $0x68] sm:$0xff]
        %v1754 = vld [vmem:[#allocation8 + $0x70] sm:$0xff]
        %v1755 = vld [vmem:[#allocation8 + $0x78] sm:$0xff]
        %1756 = vmatpush.msra.mxu0 %v1755
        %1757 = vmatpush.msra.mxu0 %v1754
        %1758 = vmatpush.msra.mxu0 %v1753
        %1759 = vmatpush.msra.mxu0 %v1752
        %1760 = vmatpush.msra.mxu0 %v1751
        %1761 = vmatpush.msra.mxu0 %v1750
        %1762 = vmatpush.msra.mxu0 %v1749
        %1763 = vmatpush.msra.mxu0 %v1748
        %1764 = vmatpush.msra.mxu0 %v1747
        %1765 = vmatpush.msra.mxu0 %v1746
        %1766 = vmatpush.msra.mxu0 %v1745
        %1767 = vmatpush.msra.mxu0 %v1744
        %1768 = vmatpush.msra.mxu0 %v1743
        %1769 = vmatpush.msra.mxu0 %v1742
        %1770 = vmatpush.msra.mxu0 %v1741
        %1771 = vmatpush.msra.mxu0 %v1740
        %1772 = vmatmul.f32.gmra.mxu0 %v1736
        %v1773 = vpop.f32.mrf.mxu0
        %v1774 = vadd.f32 0.0, %v1773
        %1775 = vmatmul.f32.gmra.mxu0 %v1737
        %v1776 = vpop.f32.mrf.mxu0
        %v1777 = vadd.f32 0.0, %v1776
        %1778 = vmatmul.f32.gmra.mxu0 %v1738
        %v1779 = vpop.f32.mrf.mxu0
        %v1780 = vadd.f32 0.0, %v1779
        %1781 = vmatmul.f32.gmra.mxu0 %v1739
        %v1782 = vpop.f32.mrf.mxu0
        %v1783 = vadd.f32 0.0, %v1782
        %1784 = vdwg.mxu0
        %1785 = vst [vmem:[%s391] sm:$0xff] %v1774
        %1786 = vst [vmem:[%s391 + $0x8] sm:$0xff] %v1777
        %1787 = vst [vmem:[%s391 + $0x10] sm:$0xff] %v1780
        %1788 = vst [vmem:[%s391 + $0x18] sm:$0xff] %v1783
        %s1789 = sand.u32 %s203, 1
        %s1790 = scalar_lea.sflag [#allocation5], %s1789
        %s1791 = sand.u32 %s203, 1
        %s1792 = smul.addr %s1791, 32
        %s1793 = scalar_lea.vmem [#allocation9], %s1792
        // Predicated region
        $region61: #{gae_forward.1} parent=47 // pred_check
          %p1794 = pneg %p213
        $region62: #{gae_forward.1} parent=47 // pred_check_branch
          %1796 = sbr.rel (%p1794) target = $region64
        $region63: #{gae_forward.1} parent=47 // pred_region
          %s1797 = smul.u32 4, %s28
          %1799 = vsyncadd %s1790, 0
          %s1800 = smul.addr %s1797, 8
          %s1801 = scalar_lea.hbm %s7, %s1800
          %s1802 = sshll.u32 %s1793, 4
          %s1803 = int_to_ptr.vmem [resolvable:$true] %s1802
          %s1804 = sshll.u32 %s1801, 4
          %s1805 = int_to_ptr.hbm [resolvable:$true] %s1804
          %1810 = dma.vmem_to_hbm [thread:$0]  %s1803, 512, %s1805, %s1790, 128, 128, 8
        $region64: #{gae_forward.1} parent=47 // pred_fallthru
          _
      $region48: #{gae_forward.1} parent=5 // pred_fallthru
        _
      %p1811 = scmp.le.s32.totalorder 2, %s23
      // Predicated region
      $region65: #{gae_forward.1} parent=5 // pred_check
        %p1812 = pneg %p1811
      $region66: #{gae_forward.1} parent=5 // pred_check_branch
        %1814 = sbr.rel (%p1812) target = $region68
      $region67: #{gae_forward.1} parent=5 // pred_region
        %s1815 = ssub.s32 %s23, 2
        // Predicated region
        $region69: #{gae_forward.1} parent=67 // pred_check
          %p1816 = pneg %p219
        $region70: #{gae_forward.1} parent=67 // pred_check_branch
          %1818 = sbr.rel (%p1816) target = $region72
        $region71: #{gae_forward.1} parent=67 // pred_region
          %s1819 = sand.u32 %s204, 1
          %s1820 = scalar_lea.sflag [#allocation5], %s1819
          %s1821 = sand.u32 %s204, 1
          %s1822 = smul.addr %s1821, 32
          %s1823 = scalar_lea.vmem [#allocation9], %s1822
          %1825 = dma.done %s1820, 512
        $region72: #{gae_forward.1} parent=67 // pred_fallthru
          _
      $region68: #{gae_forward.1} parent=5 // pred_fallthru
        _
    $region6: #{gae_forward.1} parent=1 // loop_footer
      %s27 = sadd.s32 1, %s23
    $region7: #{gae_forward.1} parent=1 // loop_footer_branch
      %22 = sbr.rel target = $region3
    $region8: #{gae_forward.1} parent=1 // loop_exit
      _
    %1826 = vsyncpa [#allocation4], 1
    %s1827 = scalar_lea.sflag [#allocation4], 1
    %1828 = vsyncpa %s1827, 1
    %1829 = vsyncpa [#allocation7], 1
    %s1830 = scalar_lea.sflag [#allocation7], 1
    %1831 = vsyncpa %s1830, 1
    %1832 = vsyncpa [#allocation5], 1
    %s1833 = scalar_lea.sflag [#allocation5], 1
    %1834 = vsyncpa %s1833, 1

</llo_original>
